<compile_context>
chip_gen: v7x
topology: tpu7x:2x2x1
jax: 0.10.0
libtpu: 0.0.40
codegen_flags: <defaults>
</compile_context>

<pallas_src>
import functools
import math

import jax
import jax.numpy as jnp
from jax.experimental import pallas as pl
from jax.experimental.pallas import tpu as pltpu

EPS = 1e-8  # cLN epsilon


def _seg_lstm_kernel(x_ref, h0_ref, c0_ref,
                     w_ih_t_ref, w_hh_t_ref, b_ref,
                     w_proj_t_ref, b_proj_ref, gamma_ref, beta_ref,
                     out_ref, h_out_ref, c_out_ref,
                     h_sc, c_sc, gx_sc, hseq_sc,
                     *, hp, t_total):
    """One grid step = one time-chunk of the SegLSTM forward.

    x_ref:        (TC, B, D)    time-major input chunk
    h0/c0:        (B, Hp)       initial state (read only on chunk 0)
    w_ih_t:       (D, 4Hp)      pre-transposed, gate order [i, f, o, g], lane-padded
    w_hh_t:       (Hp, 4Hp)     pre-transposed, same layout
    b:            (1, 4Hp)      b_ih + b_hh (f32), same layout
    w_proj_t:     (Hp, D),  b_proj: (1, D)
    gamma/beta:   (1, D)        cLN affine params (f32)
    out_ref:      (TC, B, D)
    h_out/c_out:  (B, Hp)       resident outputs (constant block index)
    h_sc/c_sc:    VMEM (B, Hp) f32 recurrent state, persists across chunks
    gx_sc:        VMEM (TC, B, 4Hp) hoisted input-gate pre-activations
    hseq_sc:      VMEM (TC, B, Hp)  per-step hidden states for the epilogue
    """
    TC, B, D = x_ref.shape
    Hp = hp
    chunk = pl.program_id(0)

    # ---- init recurrent state on the first time-chunk -----------------------
    @pl.when(chunk == 0)
    def _():
        h_sc[...] = h0_ref[...].astype(jnp.float32)
        c_sc[...] = c0_ref[...].astype(jnp.float32)

    # ---- hoisted input projection: one large MXU matmul for the whole chunk -
    x2 = x_ref[...].reshape(TC * B, D)
    gx = jnp.dot(x2, w_ih_t_ref[...], preferred_element_type=jnp.float32)
    gx = gx + b_ref[...]                                      # bias folded once
    gx_sc[...] = gx.reshape(TC, B, 4 * Hp).astype(gx_sc.dtype)

    w_hh_t = w_hh_t_ref[...]                                  # hoisted (Hp, 4Hp)

    masked_tail = (t_total % TC) != 0                         # static Python bool
    valid = t_total - chunk * TC                              # only used if masked

    # ---- serial recurrence: state carried in registers, not VMEM ------------
    def step(t, carry):
        h, c = carry
        gates = gx_sc[t].astype(jnp.float32) + jnp.dot(
            h.astype(w_hh_t.dtype), w_hh_t, preferred_element_type=jnp.float32)
        # gate columns laid out [i | f | o | g], each lane-aligned to Hp:
        ifo = jax.nn.sigmoid(gates[:, :3 * Hp])
        g = jnp.tanh(gates[:, 3 * Hp:])
        i_g = ifo[:, 0 * Hp:1 * Hp]
        f_g = ifo[:, 1 * Hp:2 * Hp]
        o_g = ifo[:, 2 * Hp:3 * Hp]
        c_new = f_g * c + i_g * g
        h_new = o_g * jnp.tanh(c_new)
        if masked_tail:
            # padded tail timesteps must not advance the state
            keep = (t < valid).astype(jnp.float32)
            h_new = keep * h_new + (1.0 - keep) * h
            c_new = keep * c_new + (1.0 - keep) * c
        hseq_sc[t] = h_new.astype(hseq_sc.dtype)
        return h_new, c_new

    unroll = True if TC <= 32 else 8
    h_fin, c_fin = jax.lax.fori_loop(
        0, TC, step, (h_sc[...], c_sc[...]), unroll=unroll)
    h_sc[...] = h_fin                                         # carry to next chunk
    c_sc[...] = c_fin

    # ---- batched epilogue: projection + cLN + residual, one store per chunk -
    hs = hseq_sc[...].reshape(TC * B, Hp)
    p = jnp.dot(hs, w_proj_t_ref[...], preferred_element_type=jnp.float32)
    p = p + b_proj_ref[...]                                   # (TC*B, D)
    mean = jnp.mean(p, axis=-1, keepdims=True)
    var = jnp.mean(jnp.square(p - mean), axis=-1, keepdims=True)  # biased var
    y = gamma_ref[...] * (p - mean) * jax.lax.rsqrt(var + EPS) + beta_ref[...]
    x_res = x_ref[...].astype(jnp.float32).reshape(TC * B, D)     # re-read (no long live range)
    out_ref[...] = (x_res + y).reshape(TC, B, D).astype(out_ref.dtype)

    # Resident outputs: only write their VMEM buffers on the final chunk.
    @pl.when(chunk == pl.num_programs(0) - 1)
    def _():
        h_out_ref[...] = h_fin.astype(h_out_ref.dtype)
        c_out_ref[...] = c_fin.astype(c_out_ref.dtype)


def _prep_gate_weight(w, H, Hp):
    """PyTorch (4H, In), gate rows [i,f,g,o] -> (In, 4*Hp), columns [i,f,o,g],
    each gate block zero-padded from H to Hp columns (lane-aligned)."""
    i_w, f_w, g_w, o_w = w[:H], w[H:2 * H], w[2 * H:3 * H], w[3 * H:4 * H]
    blocks = []
    for gate in (i_w, f_w, o_w, g_w):
        gt = gate.T                       # (In, H)
        if Hp != H:
            gt = jnp.pad(gt, ((0, 0), (0, Hp - H)))
        blocks.append(gt)
    return jnp.concatenate(blocks, axis=1)


def _prep_gate_bias(b, H, Hp):
    """Same reordering/padding for the fused bias -> (1, 4*Hp)."""
    i_b, f_b, g_b, o_b = b[:H], b[H:2 * H], b[2 * H:3 * H], b[3 * H:4 * H]
    blocks = []
    for gate in (i_b, f_b, o_b, g_b):
        gb = gate
        if Hp != H:
            gb = jnp.pad(gb, ((0, Hp - H),))
        blocks.append(gb)
    return jnp.concatenate(blocks).reshape(1, 4 * Hp)


def _pick_time_chunk(T, B_pad, D, Hp, in_itemsize, seq_itemsize, mm_itemsize,
                     budget_bytes):
    """VMEM-byte-aware time-chunk: biggest TC whose working set fits the budget."""
    fixed = ((D * 4 * Hp + Hp * 4 * Hp + Hp * D) * mm_itemsize   # weights
             + (4 * Hp + 3 * D) * 4                              # biases / cLN params
             + 4 * B_pad * Hp * 4)                               # state + h/c in/out
    per_tc = (2 * 2 * B_pad * D * in_itemsize                    # x + out, double-buffered
              + B_pad * 4 * Hp * seq_itemsize                    # gx_sc
              + B_pad * Hp * seq_itemsize)                       # hseq_sc
    cap = max(1, (budget_bytes - fixed) // per_tc)
    cap = int(min(cap, T, 256))
    if cap >= T:
        return T
    # prefer a divisor of T in [cap//2, cap] to avoid padded-tail work
    for tc in range(cap, max(cap // 2, 1) - 1, -1):
        if T % tc == 0:
            return tc
    return cap  # non-divisor: wrapper pads T and the kernel masks the tail


def seg_lstm_forward(x, hc, params, *, time_chunk=None,
                     vmem_budget_bytes=20 * 1024 * 1024):
    """Wrapper matching SegLSTM.forward(input, hc). x: (B, T, D)."""
    B, T, D = x.shape
    H = params["w_hh"].shape[1]
    dtype = x.dtype

    # bf16 inputs feed bf16 MXU matmuls / scratch; f32 inputs stay f32.
    mm_dtype = jnp.bfloat16 if dtype == jnp.bfloat16 else jnp.float32
    seq_dtype = mm_dtype

    Hp = -(-H // 128) * 128            # lane-aligned per-gate width
    pad_h = Hp - H

    if hc is None:
        h0 = jnp.zeros((B, H), dtype)
        c0 = jnp.zeros((B, H), dtype)
    else:
        h, c = hc
        h0, c0 = h[0], c[0]            # num_directions * num_layers == 1

    # Pad batch up to a sublane multiple (8); padded rows are discarded later.
    B_pad = max(8, -(-B // 8) * 8)
    pad_b = B_pad - B
    h0 = jnp.pad(h0, ((0, pad_b), (0, pad_h)))
    c0 = jnp.pad(c0, ((0, pad_b), (0, pad_h)))
    x_p = jnp.pad(x, ((0, pad_b), (0, 0), (0, 0))) if pad_b else x
    x_tm = jnp.transpose(x_p, (1, 0, 2))                        # (T, B_pad, D)

    # Gate reorder [i,f,g,o]->[i,f,o,g], per-gate lane padding, pre-transpose.
    w_ih_t = _prep_gate_weight(params["w_ih"], H, Hp).astype(mm_dtype)   # (D, 4Hp)
    w_hh_t = _prep_gate_weight(params["w_hh"], H, Hp)                    # (H, 4Hp)
    if pad_h:
        w_hh_t = jnp.pad(w_hh_t, ((0, pad_h), (0, 0)))
    w_hh_t = w_hh_t.astype(mm_dtype)                                     # (Hp, 4Hp)
    b = _prep_gate_bias(params["b_ih"] + params["b_hh"], H, Hp).astype(jnp.float32)
    w_proj_t = params["w_proj"].T                                        # (H, D)
    if pad_h:
        w_proj_t = jnp.pad(w_proj_t, ((0, pad_h), (0, 0)))
    w_proj_t = w_proj_t.astype(mm_dtype)                                 # (Hp, D)
    b_proj = params["b_proj"].reshape(1, D).astype(jnp.float32)
    gamma = params["gamma"].reshape(1, D).astype(jnp.float32)
    beta = params["beta"].reshape(1, D).astype(jnp.float32)

    in_itemsize = jnp.dtype(dtype).itemsize
    seq_itemsize = jnp.dtype(seq_dtype).itemsize
    mm_itemsize = jnp.dtype(mm_dtype).itemsize
    if time_chunk is None:
        TC = _pick_time_chunk(T, B_pad, D, Hp, in_itemsize, seq_itemsize,
                              mm_itemsize, vmem_budget_bytes)
    else:
        TC = int(time_chunk)
    n_chunks = -(-T // TC)
    T_pad = n_chunks * TC
    if T_pad != T:
        x_tm = jnp.pad(x_tm, ((0, T_pad - T), (0, 0), (0, 0)))

    needed = (2 * 2 * TC * B_pad * D * in_itemsize
              + TC * B_pad * 4 * Hp * seq_itemsize
              + TC * B_pad * Hp * seq_itemsize
              + (D * 4 * Hp + Hp * 4 * Hp + Hp * D) * mm_itemsize
              + 4 * B_pad * Hp * 4)
    vmem_limit = int(min(max(needed * 5 // 4 + (8 << 20), 32 << 20), 48 << 20))

    kernel = functools.partial(_seg_lstm_kernel, hp=Hp, t_total=T)

    grid_spec = pltpu.PrefetchScalarGridSpec(
        num_scalar_prefetch=0,
        grid=(n_chunks,),
        in_specs=[
            pl.BlockSpec((TC, B_pad, D), lambda c: (c, 0, 0)),   # x (time-chunked)
            pl.BlockSpec((B_pad, Hp), lambda c: (0, 0)),         # h0
            pl.BlockSpec((B_pad, Hp), lambda c: (0, 0)),         # c0
            pl.BlockSpec((D, 4 * Hp), lambda c: (0, 0)),         # w_ih^T
            pl.BlockSpec((Hp, 4 * Hp), lambda c: (0, 0)),        # w_hh^T
            pl.BlockSpec((1, 4 * Hp), lambda c: (0, 0)),         # fused bias
            pl.BlockSpec((Hp, D), lambda c: (0, 0)),             # w_proj^T
            pl.BlockSpec((1, D), lambda c: (0, 0)),              # b_proj
            pl.BlockSpec((1, D), lambda c: (0, 0)),              # gamma
            pl.BlockSpec((1, D), lambda c: (0, 0)),              # beta
        ],
        out_specs=[
            pl.BlockSpec((TC, B_pad, D), lambda c: (c, 0, 0)),   # out
            pl.BlockSpec((B_pad, Hp), lambda c: (0, 0)),         # h_n (resident)
            pl.BlockSpec((B_pad, Hp), lambda c: (0, 0)),         # c_n (resident)
        ],
        scratch_shapes=[
            pltpu.VMEM((B_pad, Hp), jnp.float32),                # h state
            pltpu.VMEM((B_pad, Hp), jnp.float32),                # c state
            pltpu.VMEM((TC, B_pad, 4 * Hp), seq_dtype),          # hoisted input gates
            pltpu.VMEM((TC, B_pad, Hp), seq_dtype),              # hidden-state sequence
        ],
    )

    out_tm, h_n, c_n = pl.pallas_call(
        kernel,
        out_shape=(jax.ShapeDtypeStruct((T_pad, B_pad, D), dtype),
                   jax.ShapeDtypeStruct((B_pad, Hp), dtype),
                   jax.ShapeDtypeStruct((B_pad, Hp), dtype)),
        grid_spec=grid_spec,
        compiler_params=pltpu.CompilerParams(
            dimension_semantics=("arbitrary",),   # recurrence is sequential in time
            vmem_limit_bytes=vmem_limit),
    )(x_tm, h0, c0, w_ih_t, w_hh_t, b, w_proj_t, b_proj, gamma, beta)

    out = jnp.transpose(out_tm[:T, :B, :], (1, 0, 2))            # (B, T, D)
    return out, (h_n[None, :B, :H], c_n[None, :B, :H])           # (1, B, H) each


def seg_lstm_reference(x, hc, params):
    """Pure-JAX reference implementation for validation (PyTorch gate order)."""
    B, T, D = x.shape
    H = params["w_hh"].shape[1]
    if hc is None:
        h0 = jnp.zeros((B, H), x.dtype)
        c0 = jnp.zeros((B, H), x.dtype)
    else:
        h0, c0 = hc[0][0], hc[1][0]
    w_ih, w_hh = params["w_ih"], params["w_hh"]
    b = params["b_ih"] + params["b_hh"]
    hp = jax.lax.Precision.HIGHEST

    def step(carry, x_t):
        h, c = carry
        gates = (jnp.dot(x_t, w_ih.T, precision=hp)
                 + jnp.dot(h, w_hh.T, precision=hp) + b)
        i = jax.nn.sigmoid(gates[:, :H])
        f = jax.nn.sigmoid(gates[:, H:2 * H])
        g = jnp.tanh(gates[:, 2 * H:3 * H])
        o = jax.nn.sigmoid(gates[:, 3 * H:])
        c = f * c + i * g
        h = o * jnp.tanh(c)
        return (h, c), h

    (h_n, c_n), hs = jax.lax.scan(step, (h0, c0), jnp.transpose(x, (1, 0, 2)))
    hs = jnp.transpose(hs, (1, 0, 2))                            # (B, T, H)
    p = jnp.dot(hs, params["w_proj"].T, precision=hp) + params["b_proj"]
    mean = jnp.mean(p, -1, keepdims=True)
    var = jnp.mean((p - mean) ** 2, -1, keepdims=True)
    y = params["gamma"] * (p - mean) / jnp.sqrt(var + EPS) + params["beta"]
    return x + y, (h_n[None], c_n[None])


if __name__ == "__main__":
    D, H = 16, 32                      # input_size, hidden_size
    key = jax.random.PRNGKey(0)
    keys = jax.random.split(key, 10)
    k = 1.0 / math.sqrt(H)

    params = {
        "w_ih":   jax.random.uniform(keys[0], (4 * H, D), jnp.float32, -k, k),
        "w_hh":   jax.random.uniform(keys[1], (4 * H, H), jnp.float32, -k, k),
        "b_ih":   jax.random.uniform(keys[2], (4 * H,),   jnp.float32, -k, k),
        "b_hh":   jax.random.uniform(keys[3], (4 * H,),   jnp.float32, -k, k),
        "w_proj": jax.random.uniform(keys[4], (D, H),     jnp.float32, -k, k),
        "b_proj": jax.random.uniform(keys[5], (D,),       jnp.float32, -k, k),
        "gamma":  jnp.ones((D,), jnp.float32),   # cLN gamma init = 1
        "beta":   jnp.zeros((D,), jnp.float32),  # cLN beta  init = 0
    }

    # ---- test 1: B=2, T=8, hc=None, auto time-chunk --------------------------
    B, T = 2, 8
    x = jax.random.normal(keys[6], (B, T, D), jnp.float32)
    out, (h_n, c_n) = seg_lstm_forward(x, None, params)
    jax.block_until_ready((out, h_n, c_n))
    out_ref, (h_ref, c_ref) = seg_lstm_reference(x, None, params)
    assert out.shape == (B, T, D) and h_n.shape == (1, B, H) and c_n.shape == (1, B, H)
    assert jnp.allclose(out, out_ref, atol=5e-3, rtol=5e-3), "output mismatch (t1)"
    assert jnp.allclose(h_n, h_ref, atol=5e-3, rtol=5e-3), "h mismatch (t1)"
    assert jnp.allclose(c_n, c_ref, atol=5e-3, rtol=5e-3), "c mismatch (t1)"

    # ---- test 2: awkward T (7), explicit hc, forced multi-chunk + masked tail -
    B2, T2 = 3, 7
    x2 = jax.random.normal(keys[7], (B2, T2, D), jnp.float32)
    h0 = 0.1 * jax.random.normal(keys[8], (1, B2, H), jnp.float32)
    c0 = 0.1 * jax.random.normal(keys[9], (1, B2, H), jnp.float32)
    out2, (h2, c2) = seg_lstm_forward(x2, (h0, c0), params, time_chunk=4)
    jax.block_until_ready((out2, h2, c2))
    out2_ref, (h2_ref, c2_ref) = seg_lstm_reference(x2, (h0, c0), params)
    assert jnp.allclose(out2, out2_ref, atol=5e-3, rtol=5e-3), "output mismatch (t2)"
    assert jnp.allclose(h2, h2_ref, atol=5e-3, rtol=5e-3), "h mismatch (t2)"
    assert jnp.allclose(c2, c2_ref, atol=5e-3, rtol=5e-3), "c mismatch (t2)"

    print("KERNEL_OK")
</pallas_src>

<mosaic_0001>
module attributes {stable_mosaic.version = 11 : i64} {
  func.func @_seg_lstm_kernel(%arg0: i32, %arg1: memref<8x8x16xf32, #tpu.memory_space<vmem>>, %arg2: memref<8x128xf32, #tpu.memory_space<vmem>>, %arg3: memref<8x128xf32, #tpu.memory_space<vmem>>, %arg4: memref<16x512xf32, #tpu.memory_space<vmem>>, %arg5: memref<128x512xf32, #tpu.memory_space<vmem>>, %arg6: memref<1x512xf32, #tpu.memory_space<vmem>>, %arg7: memref<128x16xf32, #tpu.memory_space<vmem>>, %arg8: memref<1x16xf32, #tpu.memory_space<vmem>>, %arg9: memref<1x16xf32, #tpu.memory_space<vmem>>, %arg10: memref<1x16xf32, #tpu.memory_space<vmem>>, %arg11: memref<8x8x16xf32, #tpu.memory_space<vmem>>, %arg12: memref<8x128xf32, #tpu.memory_space<vmem>>, %arg13: memref<8x128xf32, #tpu.memory_space<vmem>>, %arg14: memref<8x128xf32, #tpu.memory_space<vmem>>, %arg15: memref<8x128xf32, #tpu.memory_space<vmem>>, %arg16: memref<8x8x512xf32, #tpu.memory_space<vmem>>, %arg17: memref<8x8x128xf32, #tpu.memory_space<vmem>>) attributes {dimension_semantics = [#tpu.dimension_semantics<arbitrary>], iteration_bounds = array<i64: 1>, scalar_prefetch = 0 : i64, scratch_operands = 4 : i64, tpu.core_type = #tpu.core_type<tc>, window_params = [{transform_indices = @transform_0, window_bounds = array<i64: 8, 8, 16>}, {pipeline_mode = #tpu.pipeline_mode<synchronous>, transform_indices = @transform_1, window_bounds = array<i64: 8, 128>}, {pipeline_mode = #tpu.pipeline_mode<synchronous>, transform_indices = @transform_2, window_bounds = array<i64: 8, 128>}, {pipeline_mode = #tpu.pipeline_mode<synchronous>, transform_indices = @transform_3, window_bounds = array<i64: 16, 512>}, {pipeline_mode = #tpu.pipeline_mode<synchronous>, transform_indices = @transform_4, window_bounds = array<i64: 128, 512>}, {pipeline_mode = #tpu.pipeline_mode<synchronous>, transform_indices = @transform_5, window_bounds = array<i64: 1, 512>}, {pipeline_mode = #tpu.pipeline_mode<synchronous>, transform_indices = @transform_6, window_bounds = array<i64: 128, 16>}, {pipeline_mode = #tpu.pipeline_mode<synchronous>, transform_indices = @transform_7, window_bounds = array<i64: 1, 16>}, {pipeline_mode = #tpu.pipeline_mode<synchronous>, transform_indices = @transform_8, window_bounds = array<i64: 1, 16>}, {pipeline_mode = #tpu.pipeline_mode<synchronous>, transform_indices = @transform_9, window_bounds = array<i64: 1, 16>}, {transform_indices = @transform_10, window_bounds = array<i64: 8, 8, 16>}, {pipeline_mode = #tpu.pipeline_mode<synchronous>, transform_indices = @transform_11, window_bounds = array<i64: 8, 128>}, {pipeline_mode = #tpu.pipeline_mode<synchronous>, transform_indices = @transform_12, window_bounds = array<i64: 8, 128>}]} {
    %c0_i32 = arith.constant 0 : i32
    %0 = arith.cmpi eq, %arg0, %c0_i32 : i32
    %1 = arith.extui %0 : i1 to i32
    %c0_i32_0 = arith.constant 0 : i32
    %2 = arith.cmpi ne, %1, %c0_i32_0 : i32
    scf.if %2 {
      %c0_94 = arith.constant 0 : index
      %c0_95 = arith.constant 0 : index
      %256 = vector.load %arg2[%c0_94, %c0_95] : memref<8x128xf32, #tpu.memory_space<vmem>>, vector<8x128xf32>
      %c0_96 = arith.constant 0 : index
      %c0_97 = arith.constant 0 : index
      %257 = vector.load %arg14[%c0_96, %c0_97] : memref<8x128xf32, #tpu.memory_space<vmem>>, vector<8x128xf32>
      tpu.vector_store %arg14[%c0_96, %c0_97], %256 {strides = array<i32>} : memref<8x128xf32, #tpu.memory_space<vmem>>, vector<8x128xf32>,
      %c0_98 = arith.constant 0 : index
      %c0_99 = arith.constant 0 : index
      %258 = vector.load %arg3[%c0_98, %c0_99] : memref<8x128xf32, #tpu.memory_space<vmem>>, vector<8x128xf32>
      %c0_100 = arith.constant 0 : index
      %c0_101 = arith.constant 0 : index
      %259 = vector.load %arg15[%c0_100, %c0_101] : memref<8x128xf32, #tpu.memory_space<vmem>>, vector<8x128xf32>
      tpu.vector_store %arg15[%c0_100, %c0_101], %258 {strides = array<i32>} : memref<8x128xf32, #tpu.memory_space<vmem>>, vector<8x128xf32>,
    } else {
    }
    %c0 = arith.constant 0 : index
    %c0_1 = arith.constant 0 : index
    %c0_2 = arith.constant 0 : index
    %3 = vector.load %arg1[%c0, %c0_1, %c0_2] : memref<8x8x16xf32, #tpu.memory_space<vmem>>, vector<8x8x16xf32>
    %4 = vector.shape_cast %3 : vector<8x8x16xf32> to vector<64x16xf32>
    %c0_3 = arith.constant 0 : index
    %c0_4 = arith.constant 0 : index
    %5 = vector.load %arg4[%c0_3, %c0_4] : memref<16x512xf32, #tpu.memory_space<vmem>>, vector<16x512xf32>
    %cst = arith.constant dense<0.000000e+00> : vector<64x512xf32>
    %6 = tpu.matmul %4, %5, %cst {dimension_numbers = #tpu.dot_dimension_numbers<[1], [0], [0], [1], [0, 0, 1, 1], [], []>} : vector<64x16xf32>, vector<16x512xf32>, vector<64x512xf32> -> vector<64x512xf32>
    %c0_5 = arith.constant 0 : index
    %c0_6 = arith.constant 0 : index
    %7 = vector.load %arg6[%c0_5, %c0_6] : memref<1x512xf32, #tpu.memory_space<vmem>>, vector<1x512xf32>
    %8 = vector.broadcast %7 : vector<1x512xf32> to vector<64x512xf32>
    %9 = arith.addf %6, %8 : vector<64x512xf32>
    %10 = vector.shape_cast %9 : vector<64x512xf32> to vector<8x8x512xf32>
    %c0_7 = arith.constant 0 : index
    %c0_8 = arith.constant 0 : index
    %c0_9 = arith.constant 0 : index
    %11 = vector.load %arg16[%c0_7, %c0_8, %c0_9] : memref<8x8x512xf32, #tpu.memory_space<vmem>>, vector<8x8x512xf32>
    tpu.vector_store %arg16[%c0_7, %c0_8, %c0_9], %10 {strides = array<i32>} : memref<8x8x512xf32, #tpu.memory_space<vmem>>, vector<8x8x512xf32>,
    %c0_10 = arith.constant 0 : index
    %c0_11 = arith.constant 0 : index
    %12 = vector.load %arg5[%c0_10, %c0_11] : memref<128x512xf32, #tpu.memory_space<vmem>>, vector<128x512xf32>
    %c0_12 = arith.constant 0 : index
    %c0_13 = arith.constant 0 : index
    %13 = vector.load %arg14[%c0_12, %c0_13] : memref<8x128xf32, #tpu.memory_space<vmem>>, vector<8x128xf32>
    %c0_14 = arith.constant 0 : index
    %c0_15 = arith.constant 0 : index
    %14 = vector.load %arg15[%c0_14, %c0_15] : memref<8x128xf32, #tpu.memory_space<vmem>>, vector<8x128xf32>
    %c0_i32_16 = arith.constant 0 : i32
    %15 = arith.index_cast %c0_i32_16 : i32 to index
    %c0_17 = arith.constant 0 : index
    %c0_18 = arith.constant 0 : index
    %16 = vector.load %arg16[%15, %c0_17, %c0_18] : memref<8x8x512xf32, #tpu.memory_space<vmem>>, vector<1x8x512xf32>
    %17 = vector.shape_cast %16 : vector<1x8x512xf32> to vector<8x512xf32>
    %cst_19 = arith.constant dense<0.000000e+00> : vector<8x512xf32>
    %18 = tpu.matmul %13, %12, %cst_19 {dimension_numbers = #tpu.dot_dimension_numbers<[1], [0], [0], [1], [0, 0, 1, 1], [], []>} : vector<8x128xf32>, vector<128x512xf32>, vector<8x512xf32> -> vector<8x512xf32>
    %19 = arith.addf %17, %18 : vector<8x512xf32>
    %20 = vector.extract_strided_slice %19 {offsets = [0, 0], sizes = [8, 384], strides = [1, 1]} : vector<8x512xf32> to vector<8x384xf32>
    %21 = arith.negf %20 : vector<8x384xf32>
    %22 = math.exp %21 : vector<8x384xf32>
    %cst_20 = arith.constant 1.000000e+00 : f32
    %23 = vector.broadcast %cst_20 : f32 to vector<8x384xf32>
    %24 = arith.addf %23, %22 : vector<8x384xf32>
    %25 = arith.divf %23, %24 : vector<8x384xf32>
    %26 = vector.extract_strided_slice %19 {offsets = [0, 384], sizes = [8, 128], strides = [1, 1]} : vector<8x512xf32> to vector<8x128xf32>
    %27 = math.tanh %26 : vector<8x128xf32>
    %28 = vector.extract_strided_slice %25 {offsets = [0, 0], sizes = [8, 128], strides = [1, 1]} : vector<8x384xf32> to vector<8x128xf32>
    %29 = vector.extract_strided_slice %25 {offsets = [0, 128], sizes = [8, 128], strides = [1, 1]} : vector<8x384xf32> to vector<8x128xf32>
    %30 = vector.extract_strided_slice %25 {offsets = [0, 256], sizes = [8, 128], strides = [1, 1]} : vector<8x384xf32> to vector<8x128xf32>
    %31 = arith.mulf %29, %14 : vector<8x128xf32>
    %32 = arith.mulf %28, %27 : vector<8x128xf32>
    %33 = arith.addf %31, %32 : vector<8x128xf32>
    %34 = math.tanh %33 : vector<8x128xf32>
    %35 = arith.mulf %30, %34 : vector<8x128xf32>
    %36 = arith.index_cast %c0_i32_16 : i32 to index
    %c0_21 = arith.constant 0 : index
    %c0_22 = arith.constant 0 : index
    %37 = vector.load %arg17[%36, %c0_21, %c0_22] : memref<8x8x128xf32, #tpu.memory_space<vmem>>, vector<1x8x128xf32>
    %38 = vector.shape_cast %37 : vector<1x8x128xf32> to vector<8x128xf32>
    %39 = vector.shape_cast %35 : vector<8x128xf32> to vector<1x8x128xf32>
    tpu.vector_store %arg17[%36, %c0_21, %c0_22], %39 {strides = array<i32>} : memref<8x8x128xf32, #tpu.memory_space<vmem>>, vector<1x8x128xf32>,
    %c1_i32 = arith.constant 1 : i32
    %40 = arith.index_cast %c1_i32 : i32 to index
    %c0_23 = arith.constant 0 : index
    %c0_24 = arith.constant 0 : index
    %41 = vector.load %arg16[%40, %c0_23, %c0_24] : memref<8x8x512xf32, #tpu.memory_space<vmem>>, vector<1x8x512xf32>
    %42 = vector.shape_cast %41 : vector<1x8x512xf32> to vector<8x512xf32>
    %cst_25 = arith.constant dense<0.000000e+00> : vector<8x512xf32>
    %43 = tpu.matmul %35, %12, %cst_25 {dimension_numbers = #tpu.dot_dimension_numbers<[1], [0], [0], [1], [0, 0, 1, 1], [], []>} : vector<8x128xf32>, vector<128x512xf32>, vector<8x512xf32> -> vector<8x512xf32>
    %44 = arith.addf %42, %43 : vector<8x512xf32>
    %45 = vector.extract_strided_slice %44 {offsets = [0, 0], sizes = [8, 384], strides = [1, 1]} : vector<8x512xf32> to vector<8x384xf32>
    %46 = arith.negf %45 : vector<8x384xf32>
    %47 = math.exp %46 : vector<8x384xf32>
    %cst_26 = arith.constant 1.000000e+00 : f32
    %48 = vector.broadcast %cst_26 : f32 to vector<8x384xf32>
    %49 = arith.addf %48, %47 : vector<8x384xf32>
    %50 = arith.divf %48, %49 : vector<8x384xf32>
    %51 = vector.extract_strided_slice %44 {offsets = [0, 384], sizes = [8, 128], strides = [1, 1]} : vector<8x512xf32> to vector<8x128xf32>
    %52 = math.tanh %51 : vector<8x128xf32>
    %53 = vector.extract_strided_slice %50 {offsets = [0, 0], sizes = [8, 128], strides = [1, 1]} : vector<8x384xf32> to vector<8x128xf32>
    %54 = vector.extract_strided_slice %50 {offsets = [0, 128], sizes = [8, 128], strides = [1, 1]} : vector<8x384xf32> to vector<8x128xf32>
    %55 = vector.extract_strided_slice %50 {offsets = [0, 256], sizes = [8, 128], strides = [1, 1]} : vector<8x384xf32> to vector<8x128xf32>
    %56 = arith.mulf %54, %33 : vector<8x128xf32>
    %57 = arith.mulf %53, %52 : vector<8x128xf32>
    %58 = arith.addf %56, %57 : vector<8x128xf32>
    %59 = math.tanh %58 : vector<8x128xf32>
    %60 = arith.mulf %55, %59 : vector<8x128xf32>
    %61 = arith.index_cast %c1_i32 : i32 to index
    %c0_27 = arith.constant 0 : index
    %c0_28 = arith.constant 0 : index
    %62 = vector.load %arg17[%61, %c0_27, %c0_28] : memref<8x8x128xf32, #tpu.memory_space<vmem>>, vector<1x8x128xf32>
    %63 = vector.shape_cast %62 : vector<1x8x128xf32> to vector<8x128xf32>
    %64 = vector.shape_cast %60 : vector<8x128xf32> to vector<1x8x128xf32>
    tpu.vector_store %arg17[%61, %c0_27, %c0_28], %64 {strides = array<i32>} : memref<8x8x128xf32, #tpu.memory_space<vmem>>, vector<1x8x128xf32>,
    %c2_i32 = arith.constant 2 : i32
    %65 = arith.index_cast %c2_i32 : i32 to index
    %c0_29 = arith.constant 0 : index
    %c0_30 = arith.constant 0 : index
    %66 = vector.load %arg16[%65, %c0_29, %c0_30] : memref<8x8x512xf32, #tpu.memory_space<vmem>>, vector<1x8x512xf32>
    %67 = vector.shape_cast %66 : vector<1x8x512xf32> to vector<8x512xf32>
    %cst_31 = arith.constant dense<0.000000e+00> : vector<8x512xf32>
    %68 = tpu.matmul %60, %12, %cst_31 {dimension_numbers = #tpu.dot_dimension_numbers<[1], [0], [0], [1], [0, 0, 1, 1], [], []>} : vector<8x128xf32>, vector<128x512xf32>, vector<8x512xf32> -> vector<8x512xf32>
    %69 = arith.addf %67, %68 : vector<8x512xf32>
    %70 = vector.extract_strided_slice %69 {offsets = [0, 0], sizes = [8, 384], strides = [1, 1]} : vector<8x512xf32> to vector<8x384xf32>
    %71 = arith.negf %70 : vector<8x384xf32>
    %72 = math.exp %71 : vector<8x384xf32>
    %cst_32 = arith.constant 1.000000e+00 : f32
    %73 = vector.broadcast %cst_32 : f32 to vector<8x384xf32>
    %74 = arith.addf %73, %72 : vector<8x384xf32>
    %75 = arith.divf %73, %74 : vector<8x384xf32>
    %76 = vector.extract_strided_slice %69 {offsets = [0, 384], sizes = [8, 128], strides = [1, 1]} : vector<8x512xf32> to vector<8x128xf32>
    %77 = math.tanh %76 : vector<8x128xf32>
    %78 = vector.extract_strided_slice %75 {offsets = [0, 0], sizes = [8, 128], strides = [1, 1]} : vector<8x384xf32> to vector<8x128xf32>
    %79 = vector.extract_strided_slice %75 {offsets = [0, 128], sizes = [8, 128], strides = [1, 1]} : vector<8x384xf32> to vector<8x128xf32>
    %80 = vector.extract_strided_slice %75 {offsets = [0, 256], sizes = [8, 128], strides = [1, 1]} : vector<8x384xf32> to vector<8x128xf32>
    %81 = arith.mulf %79, %58 : vector<8x128xf32>
    %82 = arith.mulf %78, %77 : vector<8x128xf32>
    %83 = arith.addf %81, %82 : vector<8x128xf32>
    %84 = math.tanh %83 : vector<8x128xf32>
    %85 = arith.mulf %80, %84 : vector<8x128xf32>
    %86 = arith.index_cast %c2_i32 : i32 to index
    %c0_33 = arith.constant 0 : index
    %c0_34 = arith.constant 0 : index
    %87 = vector.load %arg17[%86, %c0_33, %c0_34] : memref<8x8x128xf32, #tpu.memory_space<vmem>>, vector<1x8x128xf32>
    %88 = vector.shape_cast %87 : vector<1x8x128xf32> to vector<8x128xf32>
    %89 = vector.shape_cast %85 : vector<8x128xf32> to vector<1x8x128xf32>
    tpu.vector_store %arg17[%86, %c0_33, %c0_34], %89 {strides = array<i32>} : memref<8x8x128xf32, #tpu.memory_space<vmem>>, vector<1x8x128xf32>,
    %c3_i32 = arith.constant 3 : i32
    %90 = arith.index_cast %c3_i32 : i32 to index
    %c0_35 = arith.constant 0 : index
    %c0_36 = arith.constant 0 : index
    %91 = vector.load %arg16[%90, %c0_35, %c0_36] : memref<8x8x512xf32, #tpu.memory_space<vmem>>, vector<1x8x512xf32>
    %92 = vector.shape_cast %91 : vector<1x8x512xf32> to vector<8x512xf32>
    %cst_37 = arith.constant dense<0.000000e+00> : vector<8x512xf32>
    %93 = tpu.matmul %85, %12, %cst_37 {dimension_numbers = #tpu.dot_dimension_numbers<[1], [0], [0], [1], [0, 0, 1, 1], [], []>} : vector<8x128xf32>, vector<128x512xf32>, vector<8x512xf32> -> vector<8x512xf32>
    %94 = arith.addf %92, %93 : vector<8x512xf32>
    %95 = vector.extract_strided_slice %94 {offsets = [0, 0], sizes = [8, 384], strides = [1, 1]} : vector<8x512xf32> to vector<8x384xf32>
    %96 = arith.negf %95 : vector<8x384xf32>
    %97 = math.exp %96 : vector<8x384xf32>
    %cst_38 = arith.constant 1.000000e+00 : f32
    %98 = vector.broadcast %cst_38 : f32 to vector<8x384xf32>
    %99 = arith.addf %98, %97 : vector<8x384xf32>
    %100 = arith.divf %98, %99 : vector<8x384xf32>
    %101 = vector.extract_strided_slice %94 {offsets = [0, 384], sizes = [8, 128], strides = [1, 1]} : vector<8x512xf32> to vector<8x128xf32>
    %102 = math.tanh %101 : vector<8x128xf32>
    %103 = vector.extract_strided_slice %100 {offsets = [0, 0], sizes = [8, 128], strides = [1, 1]} : vector<8x384xf32> to vector<8x128xf32>
    %104 = vector.extract_strided_slice %100 {offsets = [0, 128], sizes = [8, 128], strides = [1, 1]} : vector<8x384xf32> to vector<8x128xf32>
    %105 = vector.extract_strided_slice %100 {offsets = [0, 256], sizes = [8, 128], strides = [1, 1]} : vector<8x384xf32> to vector<8x128xf32>
    %106 = arith.mulf %104, %83 : vector<8x128xf32>
    %107 = arith.mulf %103, %102 : vector<8x128xf32>
    %108 = arith.addf %106, %107 : vector<8x128xf32>
    %109 = math.tanh %108 : vector<8x128xf32>
    %110 = arith.mulf %105, %109 : vector<8x128xf32>
    %111 = arith.index_cast %c3_i32 : i32 to index
    %c0_39 = arith.constant 0 : index
    %c0_40 = arith.constant 0 : index
    %112 = vector.load %arg17[%111, %c0_39, %c0_40] : memref<8x8x128xf32, #tpu.memory_space<vmem>>, vector<1x8x128xf32>
    %113 = vector.shape_cast %112 : vector<1x8x128xf32> to vector<8x128xf32>
    %114 = vector.shape_cast %110 : vector<8x128xf32> to vector<1x8x128xf32>
    tpu.vector_store %arg17[%111, %c0_39, %c0_40], %114 {strides = array<i32>} : memref<8x8x128xf32, #tpu.memory_space<vmem>>, vector<1x8x128xf32>,
    %c4_i32 = arith.constant 4 : i32
    %115 = arith.index_cast %c4_i32 : i32 to index
    %c0_41 = arith.constant 0 : index
    %c0_42 = arith.constant 0 : index
    %116 = vector.load %arg16[%115, %c0_41, %c0_42] : memref<8x8x512xf32, #tpu.memory_space<vmem>>, vector<1x8x512xf32>
    %117 = vector.shape_cast %116 : vector<1x8x512xf32> to vector<8x512xf32>
    %cst_43 = arith.constant dense<0.000000e+00> : vector<8x512xf32>
    %118 = tpu.matmul %110, %12, %cst_43 {dimension_numbers = #tpu.dot_dimension_numbers<[1], [0], [0], [1], [0, 0, 1, 1], [], []>} : vector<8x128xf32>, vector<128x512xf32>, vector<8x512xf32> -> vector<8x512xf32>
    %119 = arith.addf %117, %118 : vector<8x512xf32>
    %120 = vector.extract_strided_slice %119 {offsets = [0, 0], sizes = [8, 384], strides = [1, 1]} : vector<8x512xf32> to vector<8x384xf32>
    %121 = arith.negf %120 : vector<8x384xf32>
    %122 = math.exp %121 : vector<8x384xf32>
    %cst_44 = arith.constant 1.000000e+00 : f32
    %123 = vector.broadcast %cst_44 : f32 to vector<8x384xf32>
    %124 = arith.addf %123, %122 : vector<8x384xf32>
    %125 = arith.divf %123, %124 : vector<8x384xf32>
    %126 = vector.extract_strided_slice %119 {offsets = [0, 384], sizes = [8, 128], strides = [1, 1]} : vector<8x512xf32> to vector<8x128xf32>
    %127 = math.tanh %126 : vector<8x128xf32>
    %128 = vector.extract_strided_slice %125 {offsets = [0, 0], sizes = [8, 128], strides = [1, 1]} : vector<8x384xf32> to vector<8x128xf32>
    %129 = vector.extract_strided_slice %125 {offsets = [0, 128], sizes = [8, 128], strides = [1, 1]} : vector<8x384xf32> to vector<8x128xf32>
    %130 = vector.extract_strided_slice %125 {offsets = [0, 256], sizes = [8, 128], strides = [1, 1]} : vector<8x384xf32> to vector<8x128xf32>
    %131 = arith.mulf %129, %108 : vector<8x128xf32>
    %132 = arith.mulf %128, %127 : vector<8x128xf32>
    %133 = arith.addf %131, %132 : vector<8x128xf32>
    %134 = math.tanh %133 : vector<8x128xf32>
    %135 = arith.mulf %130, %134 : vector<8x128xf32>
    %136 = arith.index_cast %c4_i32 : i32 to index
    %c0_45 = arith.constant 0 : index
    %c0_46 = arith.constant 0 : index
    %137 = vector.load %arg17[%136, %c0_45, %c0_46] : memref<8x8x128xf32, #tpu.memory_space<vmem>>, vector<1x8x128xf32>
    %138 = vector.shape_cast %137 : vector<1x8x128xf32> to vector<8x128xf32>
    %139 = vector.shape_cast %135 : vector<8x128xf32> to vector<1x8x128xf32>
    tpu.vector_store %arg17[%136, %c0_45, %c0_46], %139 {strides = array<i32>} : memref<8x8x128xf32, #tpu.memory_space<vmem>>, vector<1x8x128xf32>,
    %c5_i32 = arith.constant 5 : i32
    %140 = arith.index_cast %c5_i32 : i32 to index
    %c0_47 = arith.constant 0 : index
    %c0_48 = arith.constant 0 : index
    %141 = vector.load %arg16[%140, %c0_47, %c0_48] : memref<8x8x512xf32, #tpu.memory_space<vmem>>, vector<1x8x512xf32>
    %142 = vector.shape_cast %141 : vector<1x8x512xf32> to vector<8x512xf32>
    %cst_49 = arith.constant dense<0.000000e+00> : vector<8x512xf32>
    %143 = tpu.matmul %135, %12, %cst_49 {dimension_numbers = #tpu.dot_dimension_numbers<[1], [0], [0], [1], [0, 0, 1, 1], [], []>} : vector<8x128xf32>, vector<128x512xf32>, vector<8x512xf32> -> vector<8x512xf32>
    %144 = arith.addf %142, %143 : vector<8x512xf32>
    %145 = vector.extract_strided_slice %144 {offsets = [0, 0], sizes = [8, 384], strides = [1, 1]} : vector<8x512xf32> to vector<8x384xf32>
    %146 = arith.negf %145 : vector<8x384xf32>
    %147 = math.exp %146 : vector<8x384xf32>
    %cst_50 = arith.constant 1.000000e+00 : f32
    %148 = vector.broadcast %cst_50 : f32 to vector<8x384xf32>
    %149 = arith.addf %148, %147 : vector<8x384xf32>
    %150 = arith.divf %148, %149 : vector<8x384xf32>
    %151 = vector.extract_strided_slice %144 {offsets = [0, 384], sizes = [8, 128], strides = [1, 1]} : vector<8x512xf32> to vector<8x128xf32>
    %152 = math.tanh %151 : vector<8x128xf32>
    %153 = vector.extract_strided_slice %150 {offsets = [0, 0], sizes = [8, 128], strides = [1, 1]} : vector<8x384xf32> to vector<8x128xf32>
    %154 = vector.extract_strided_slice %150 {offsets = [0, 128], sizes = [8, 128], strides = [1, 1]} : vector<8x384xf32> to vector<8x128xf32>
    %155 = vector.extract_strided_slice %150 {offsets = [0, 256], sizes = [8, 128], strides = [1, 1]} : vector<8x384xf32> to vector<8x128xf32>
    %156 = arith.mulf %154, %133 : vector<8x128xf32>
    %157 = arith.mulf %153, %152 : vector<8x128xf32>
    %158 = arith.addf %156, %157 : vector<8x128xf32>
    %159 = math.tanh %158 : vector<8x128xf32>
    %160 = arith.mulf %155, %159 : vector<8x128xf32>
    %161 = arith.index_cast %c5_i32 : i32 to index
    %c0_51 = arith.constant 0 : index
    %c0_52 = arith.constant 0 : index
    %162 = vector.load %arg17[%161, %c0_51, %c0_52] : memref<8x8x128xf32, #tpu.memory_space<vmem>>, vector<1x8x128xf32>
    %163 = vector.shape_cast %162 : vector<1x8x128xf32> to vector<8x128xf32>
    %164 = vector.shape_cast %160 : vector<8x128xf32> to vector<1x8x128xf32>
    tpu.vector_store %arg17[%161, %c0_51, %c0_52], %164 {strides = array<i32>} : memref<8x8x128xf32, #tpu.memory_space<vmem>>, vector<1x8x128xf32>,
    %c6_i32 = arith.constant 6 : i32
    %165 = arith.index_cast %c6_i32 : i32 to index
    %c0_53 = arith.constant 0 : index
    %c0_54 = arith.constant 0 : index
    %166 = vector.load %arg16[%165, %c0_53, %c0_54] : memref<8x8x512xf32, #tpu.memory_space<vmem>>, vector<1x8x512xf32>
    %167 = vector.shape_cast %166 : vector<1x8x512xf32> to vector<8x512xf32>
    %cst_55 = arith.constant dense<0.000000e+00> : vector<8x512xf32>
    %168 = tpu.matmul %160, %12, %cst_55 {dimension_numbers = #tpu.dot_dimension_numbers<[1], [0], [0], [1], [0, 0, 1, 1], [], []>} : vector<8x128xf32>, vector<128x512xf32>, vector<8x512xf32> -> vector<8x512xf32>
    %169 = arith.addf %167, %168 : vector<8x512xf32>
    %170 = vector.extract_strided_slice %169 {offsets = [0, 0], sizes = [8, 384], strides = [1, 1]} : vector<8x512xf32> to vector<8x384xf32>
    %171 = arith.negf %170 : vector<8x384xf32>
    %172 = math.exp %171 : vector<8x384xf32>
    %cst_56 = arith.constant 1.000000e+00 : f32
    %173 = vector.broadcast %cst_56 : f32 to vector<8x384xf32>
    %174 = arith.addf %173, %172 : vector<8x384xf32>
    %175 = arith.divf %173, %174 : vector<8x384xf32>
    %176 = vector.extract_strided_slice %169 {offsets = [0, 384], sizes = [8, 128], strides = [1, 1]} : vector<8x512xf32> to vector<8x128xf32>
    %177 = math.tanh %176 : vector<8x128xf32>
    %178 = vector.extract_strided_slice %175 {offsets = [0, 0], sizes = [8, 128], strides = [1, 1]} : vector<8x384xf32> to vector<8x128xf32>
    %179 = vector.extract_strided_slice %175 {offsets = [0, 128], sizes = [8, 128], strides = [1, 1]} : vector<8x384xf32> to vector<8x128xf32>
    %180 = vector.extract_strided_slice %175 {offsets = [0, 256], sizes = [8, 128], strides = [1, 1]} : vector<8x384xf32> to vector<8x128xf32>
    %181 = arith.mulf %179, %158 : vector<8x128xf32>
    %182 = arith.mulf %178, %177 : vector<8x128xf32>
    %183 = arith.addf %181, %182 : vector<8x128xf32>
    %184 = math.tanh %183 : vector<8x128xf32>
    %185 = arith.mulf %180, %184 : vector<8x128xf32>
    %186 = arith.index_cast %c6_i32 : i32 to index
    %c0_57 = arith.constant 0 : index
    %c0_58 = arith.constant 0 : index
    %187 = vector.load %arg17[%186, %c0_57, %c0_58] : memref<8x8x128xf32, #tpu.memory_space<vmem>>, vector<1x8x128xf32>
    %188 = vector.shape_cast %187 : vector<1x8x128xf32> to vector<8x128xf32>
    %189 = vector.shape_cast %185 : vector<8x128xf32> to vector<1x8x128xf32>
    tpu.vector_store %arg17[%186, %c0_57, %c0_58], %189 {strides = array<i32>} : memref<8x8x128xf32, #tpu.memory_space<vmem>>, vector<1x8x128xf32>,
    %c7_i32 = arith.constant 7 : i32
    %190 = arith.index_cast %c7_i32 : i32 to index
    %c0_59 = arith.constant 0 : index
    %c0_60 = arith.constant 0 : index
    %191 = vector.load %arg16[%190, %c0_59, %c0_60] : memref<8x8x512xf32, #tpu.memory_space<vmem>>, vector<1x8x512xf32>
    %192 = vector.shape_cast %191 : vector<1x8x512xf32> to vector<8x512xf32>
    %cst_61 = arith.constant dense<0.000000e+00> : vector<8x512xf32>
    %193 = tpu.matmul %185, %12, %cst_61 {dimension_numbers = #tpu.dot_dimension_numbers<[1], [0], [0], [1], [0, 0, 1, 1], [], []>} : vector<8x128xf32>, vector<128x512xf32>, vector<8x512xf32> -> vector<8x512xf32>
    %194 = arith.addf %192, %193 : vector<8x512xf32>
    %195 = vector.extract_strided_slice %194 {offsets = [0, 0], sizes = [8, 384], strides = [1, 1]} : vector<8x512xf32> to vector<8x384xf32>
    %196 = arith.negf %195 : vector<8x384xf32>
    %197 = math.exp %196 : vector<8x384xf32>
    %cst_62 = arith.constant 1.000000e+00 : f32
    %198 = vector.broadcast %cst_62 : f32 to vector<8x384xf32>
    %199 = arith.addf %198, %197 : vector<8x384xf32>
    %200 = arith.divf %198, %199 : vector<8x384xf32>
    %201 = vector.extract_strided_slice %194 {offsets = [0, 384], sizes = [8, 128], strides = [1, 1]} : vector<8x512xf32> to vector<8x128xf32>
    %202 = math.tanh %201 : vector<8x128xf32>
    %203 = vector.extract_strided_slice %200 {offsets = [0, 0], sizes = [8, 128], strides = [1, 1]} : vector<8x384xf32> to vector<8x128xf32>
    %204 = vector.extract_strided_slice %200 {offsets = [0, 128], sizes = [8, 128], strides = [1, 1]} : vector<8x384xf32> to vector<8x128xf32>
    %205 = vector.extract_strided_slice %200 {offsets = [0, 256], sizes = [8, 128], strides = [1, 1]} : vector<8x384xf32> to vector<8x128xf32>
    %206 = arith.mulf %204, %183 : vector<8x128xf32>
    %207 = arith.mulf %203, %202 : vector<8x128xf32>
    %208 = arith.addf %206, %207 : vector<8x128xf32>
    %209 = math.tanh %208 : vector<8x128xf32>
    %210 = arith.mulf %205, %209 : vector<8x128xf32>
    %211 = arith.index_cast %c7_i32 : i32 to index
    %c0_63 = arith.constant 0 : index
    %c0_64 = arith.constant 0 : index
    %212 = vector.load %arg17[%211, %c0_63, %c0_64] : memref<8x8x128xf32, #tpu.memory_space<vmem>>, vector<1x8x128xf32>
    %213 = vector.shape_cast %212 : vector<1x8x128xf32> to vector<8x128xf32>
    %214 = vector.shape_cast %210 : vector<8x128xf32> to vector<1x8x128xf32>
    tpu.vector_store %arg17[%211, %c0_63, %c0_64], %214 {strides = array<i32>} : memref<8x8x128xf32, #tpu.memory_space<vmem>>, vector<1x8x128xf32>,
    %c8_i32 = arith.constant 8 : i32
    %c0_65 = arith.constant 0 : index
    %c0_66 = arith.constant 0 : index
    %215 = vector.load %arg14[%c0_65, %c0_66] : memref<8x128xf32, #tpu.memory_space<vmem>>, vector<8x128xf32>
    tpu.vector_store %arg14[%c0_65, %c0_66], %210 {strides = array<i32>} : memref<8x128xf32, #tpu.memory_space<vmem>>, vector<8x128xf32>,
    %c0_67 = arith.constant 0 : index
    %c0_68 = arith.constant 0 : index
    %216 = vector.load %arg15[%c0_67, %c0_68] : memref<8x128xf32, #tpu.memory_space<vmem>>, vector<8x128xf32>
    tpu.vector_store %arg15[%c0_67, %c0_68], %208 {strides = array<i32>} : memref<8x128xf32, #tpu.memory_space<vmem>>, vector<8x128xf32>,
    %c0_69 = arith.constant 0 : index
    %c0_70 = arith.constant 0 : index
    %c0_71 = arith.constant 0 : index
    %217 = vector.load %arg17[%c0_69, %c0_70, %c0_71] : memref<8x8x128xf32, #tpu.memory_space<vmem>>, vector<8x8x128xf32>
    %218 = vector.shape_cast %217 : vector<8x8x128xf32> to vector<64x128xf32>
    %c0_72 = arith.constant 0 : index
    %c0_73 = arith.constant 0 : index
    %219 = vector.load %arg7[%c0_72, %c0_73] : memref<128x16xf32, #tpu.memory_space<vmem>>, vector<128x16xf32>
    %cst_74 = arith.constant dense<0.000000e+00> : vector<64x16xf32>
    %220 = tpu.matmul %218, %219, %cst_74 {dimension_numbers = #tpu.dot_dimension_numbers<[1], [0], [0], [1], [0, 0, 1, 1], [], []>} : vector<64x128xf32>, vector<128x16xf32>, vector<64x16xf32> -> vector<64x16xf32>
    %c0_75 = arith.constant 0 : index
    %c0_76 = arith.constant 0 : index
    %221 = vector.load %arg8[%c0_75, %c0_76] : memref<1x16xf32, #tpu.memory_space<vmem>>, vector<1x16xf32>
    %222 = vector.broadcast %221 : vector<1x16xf32> to vector<64x16xf32>
    %223 = arith.addf %220, %222 : vector<64x16xf32>
    %cst_77 = arith.constant dense<0.000000e+00> : vector<64xf32>
    %224 = vector.multi_reduction <add>, %223, %cst_77 [1] : vector<64x16xf32> to vector<64xf32>
    %225 = vector.shape_cast %224 : vector<64xf32> to vector<64x1xf32>
    %cst_78 = arith.constant 1.600000e+01 : f32
    %226 = vector.broadcast %cst_78 : f32 to vector<64x1xf32>
    %227 = arith.divf %225, %226 : vector<64x1xf32>
    %228 = vector.broadcast %227 : vector<64x1xf32> to vector<64x16xf32>
    %229 = arith.subf %223, %228 : vector<64x16xf32>
    %230 = arith.mulf %229, %229 : vector<64x16xf32>
    %cst_79 = arith.constant dense<0.000000e+00> : vector<64xf32>
    %231 = vector.multi_reduction <add>, %230, %cst_79 [1] : vector<64x16xf32> to vector<64xf32>
    %232 = vector.shape_cast %231 : vector<64xf32> to vector<64x1xf32>
    %cst_80 = arith.constant 1.600000e+01 : f32
    %233 = vector.broadcast %cst_80 : f32 to vector<64x1xf32>
    %234 = arith.divf %232, %233 : vector<64x1xf32>
    %c0_81 = arith.constant 0 : index
    %c0_82 = arith.constant 0 : index
    %235 = vector.load %arg9[%c0_81, %c0_82] : memref<1x16xf32, #tpu.memory_space<vmem>>, vector<1x16xf32>
    %236 = vector.broadcast %227 : vector<64x1xf32> to vector<64x16xf32>
    %237 = arith.subf %223, %236 : vector<64x16xf32>
    %238 = vector.broadcast %235 : vector<1x16xf32> to vector<64x16xf32>
    %239 = arith.mulf %238, %237 : vector<64x16xf32>
    %cst_83 = arith.constant 9.99999993E-9 : f32
    %240 = vector.broadcast %cst_83 : f32 to vector<64x1xf32>
    %241 = arith.addf %234, %240 : vector<64x1xf32>
    %242 = math.rsqrt %241 : vector<64x1xf32>
    %243 = vector.broadcast %242 : vector<64x1xf32> to vector<64x16xf32>
    %244 = arith.mulf %239, %243 : vector<64x16xf32>
    %c0_84 = arith.constant 0 : index
    %c0_85 = arith.constant 0 : index
    %245 = vector.load %arg10[%c0_84, %c0_85] : memref<1x16xf32, #tpu.memory_space<vmem>>, vector<1x16xf32>
    %246 = vector.broadcast %245 : vector<1x16xf32> to vector<64x16xf32>
    %247 = arith.addf %244, %246 : vector<64x16xf32>
    %c0_86 = arith.constant 0 : index
    %c0_87 = arith.constant 0 : index
    %c0_88 = arith.constant 0 : index
    %248 = vector.load %arg1[%c0_86, %c0_87, %c0_88] : memref<8x8x16xf32, #tpu.memory_space<vmem>>, vector<8x8x16xf32>
    %249 = vector.shape_cast %248 : vector<8x8x16xf32> to vector<64x16xf32>
    %250 = arith.addf %249, %247 : vector<64x16xf32>
    %251 = vector.shape_cast %250 : vector<64x16xf32> to vector<8x8x16xf32>
    %c0_89 = arith.constant 0 : index
    %c0_90 = arith.constant 0 : index
    %c0_91 = arith.constant 0 : index
    %252 = vector.load %arg11[%c0_89, %c0_90, %c0_91] : memref<8x8x16xf32, #tpu.memory_space<vmem>>, vector<8x8x16xf32>
    tpu.vector_store %arg11[%c0_89, %c0_90, %c0_91], %251 {strides = array<i32>} : memref<8x8x16xf32, #tpu.memory_space<vmem>>, vector<8x8x16xf32>,
    %c0_i32_92 = arith.constant 0 : i32
    %253 = arith.cmpi eq, %arg0, %c0_i32_92 : i32
    %254 = arith.extui %253 : i1 to i32
    %c0_i32_93 = arith.constant 0 : i32
    %255 = arith.cmpi ne, %254, %c0_i32_93 : i32
    scf.if %255 {
      %c0_94 = arith.constant 0 : index
      %c0_95 = arith.constant 0 : index
      %256 = vector.load %arg12[%c0_94, %c0_95] : memref<8x128xf32, #tpu.memory_space<vmem>>, vector<8x128xf32>
      tpu.vector_store %arg12[%c0_94, %c0_95], %210 {strides = array<i32>} : memref<8x128xf32, #tpu.memory_space<vmem>>, vector<8x128xf32>,
      %c0_96 = arith.constant 0 : index
      %c0_97 = arith.constant 0 : index
      %257 = vector.load %arg13[%c0_96, %c0_97] : memref<8x128xf32, #tpu.memory_space<vmem>>, vector<8x128xf32>
      tpu.vector_store %arg13[%c0_96, %c0_97], %208 {strides = array<i32>} : memref<8x128xf32, #tpu.memory_space<vmem>>, vector<8x128xf32>,
    } else {
    }
    return
  }
  func.func @transform_0(%arg0: i32) -> (i32, i32, i32) {
    %c0_i32 = arith.constant 0 : i32
    %c0_i32_0 = arith.constant 0 : i32
    %c0_i32_1 = arith.constant 0 : i32
    return %arg0, %c0_i32, %c0_i32_0 : i32, i32, i32
  }
  func.func @transform_1(%arg0: i32) -> (i32, i32) {
    %c0_i32 = arith.constant 0 : i32
    %c0_i32_0 = arith.constant 0 : i32
    %c0_i32_1 = arith.constant 0 : i32
    return %c0_i32, %c0_i32_0 : i32, i32
  }
  func.func @transform_2(%arg0: i32) -> (i32, i32) {
    %c0_i32 = arith.constant 0 : i32
    %c0_i32_0 = arith.constant 0 : i32
    %c0_i32_1 = arith.constant 0 : i32
    return %c0_i32, %c0_i32_0 : i32, i32
  }
  func.func @transform_3(%arg0: i32) -> (i32, i32) {
    %c0_i32 = arith.constant 0 : i32
    %c0_i32_0 = arith.constant 0 : i32
    %c0_i32_1 = arith.constant 0 : i32
    return %c0_i32, %c0_i32_0 : i32, i32
  }
  func.func @transform_4(%arg0: i32) -> (i32, i32) {
    %c0_i32 = arith.constant 0 : i32
    %c0_i32_0 = arith.constant 0 : i32
    %c0_i32_1 = arith.constant 0 : i32
    return %c0_i32, %c0_i32_0 : i32, i32
  }
  func.func @transform_5(%arg0: i32) -> (i32, i32) {
    %c0_i32 = arith.constant 0 : i32
    %c0_i32_0 = arith.constant 0 : i32
    %c0_i32_1 = arith.constant 0 : i32
    return %c0_i32, %c0_i32_0 : i32, i32
  }
  func.func @transform_6(%arg0: i32) -> (i32, i32) {
    %c0_i32 = arith.constant 0 : i32
    %c0_i32_0 = arith.constant 0 : i32
    %c0_i32_1 = arith.constant 0 : i32
    return %c0_i32, %c0_i32_0 : i32, i32
  }
  func.func @transform_7(%arg0: i32) -> (i32, i32) {
    %c0_i32 = arith.constant 0 : i32
    %c0_i32_0 = arith.constant 0 : i32
    %c0_i32_1 = arith.constant 0 : i32
    return %c0_i32, %c0_i32_0 : i32, i32
  }
  func.func @transform_8(%arg0: i32) -> (i32, i32) {
    %c0_i32 = arith.constant 0 : i32
    %c0_i32_0 = arith.constant 0 : i32
    %c0_i32_1 = arith.constant 0 : i32
    return %c0_i32, %c0_i32_0 : i32, i32
  }
  func.func @transform_9(%arg0: i32) -> (i32, i32) {
    %c0_i32 = arith.constant 0 : i32
    %c0_i32_0 = arith.constant 0 : i32
    %c0_i32_1 = arith.constant 0 : i32
    return %c0_i32, %c0_i32_0 : i32, i32
  }
  func.func @transform_10(%arg0: i32) -> (i32, i32, i32) {
    %c0_i32 = arith.constant 0 : i32
    %c0_i32_0 = arith.constant 0 : i32
    %c0_i32_1 = arith.constant 0 : i32
    return %arg0, %c0_i32, %c0_i32_0 : i32, i32, i32
  }
  func.func @transform_11(%arg0: i32) -> (i32, i32) {
    %c0_i32 = arith.constant 0 : i32
    %c0_i32_0 = arith.constant 0 : i32
    %c0_i32_1 = arith.constant 0 : i32
    return %c0_i32, %c0_i32_0 : i32, i32
  }
  func.func @transform_12(%arg0: i32) -> (i32, i32) {
    %c0_i32 = arith.constant 0 : i32
    %c0_i32_0 = arith.constant 0 : i32
    %c0_i32_1 = arith.constant 0 : i32
    return %c0_i32, %c0_i32_0 : i32, i32
  }
}

</mosaic_0001>

<llo_original>
// kernel: tpu_custom_call.1
$region0: #{tpu_custom_call.1}
  #allocation0 [shape = 'u32[]', space=smem, size = 0x4, offset = 0x4, fixed_abs, tag = 'smem constant byte address 0x4 - core index']
  #allocation1 [shape = 'u32[144,128]{1,0:T(1,128)}', space=vmem, size = 0x12000, scoped, tag = 'internal scratch']
  #allocation2 [shape = 'f32[8,128]{1,0:T(8,128)}', space=vmem, size = 0x1000, scoped, tag = 'scratch operand']
  #allocation3 [shape = 'f32[8,128]{1,0:T(8,128)}', space=vmem, size = 0x1000, scoped, tag = 'scratch operand']
  #allocation4 [shape = 'f32[8,8,512]{2,1,0:T(8,128)}', space=vmem, size = 0x20000, scoped, tag = 'scratch operand']
  #allocation5 [shape = 'f32[8,8,128]{2,1,0:T(8,128)}', space=vmem, size = 0x8000, scoped, tag = 'scratch operand']
  %s0 = inlined_call_operand.vmem [shape: f32[8,8,16], index: 0, kind: input, shape index: {}]
  %s1 = inlined_call_operand.vmem [shape: f32[8,128], index: 1, kind: input, shape index: {}]
  %s2 = inlined_call_operand.vmem [shape: f32[8,128], index: 2, kind: input, shape index: {}]
  %s3 = inlined_call_operand.vmem [shape: f32[16,512], index: 3, kind: input, shape index: {}]
  %s4 = inlined_call_operand.hbm [shape: f32[128,512], index: 4, kind: input, shape index: {}]
  %s5 = inlined_call_operand.vmem [shape: f32[1,512], index: 5, kind: input, shape index: {}]
  %s6 = inlined_call_operand.vmem [shape: f32[128,16], index: 6, kind: input, shape index: {}]
  %s7 = inlined_call_operand.vmem [shape: f32[1,16], index: 7, kind: input, shape index: {}]
  %s8 = inlined_call_operand.vmem [shape: f32[1,16], index: 8, kind: input, shape index: {}]
  %s9 = inlined_call_operand.vmem [shape: f32[1,16], index: 9, kind: input, shape index: {}]
  %s10 = inlined_call_operand.hbm [shape: f32[8,8,16], index: 10, kind: output, shape index: {0}]
  %s11 = inlined_call_operand.hbm [shape: f32[8,128], index: 11, kind: output, shape index: {1}]
  %s12 = inlined_call_operand.hbm [shape: f32[8,128], index: 12, kind: output, shape index: {2}]
  %13 = xla_tuple %s10, %s11, %s12
  %s14 = sld [smem:[#allocation0]]
  $region78: #{tpu_custom_call.1} parent=0
    _
  %s16 = ssub.s32 1, %s14
  %s17 = scalar_select 0, %s16, %s14
  $region1: #{tpu_custom_call.1} parent=0
    #allocation6 [shape = 'u8[262144]{0}', space=vmem, size = 0x40000, scoped, tag = 'input window, operand 4, single buffered']
    #allocation7 [shape = 's32[1]{0}', space=sflag, size = 0x4, scoped, tag = 'scoped memory for tpu_custom_call.1']
    #allocation8 [shape = 's32[1]{0}', space=sflag, size = 0x4, scoped, tag = 'scoped memory for tpu_custom_call.1']
    #allocation9 [shape = 'u8[32768]{0}', space=vmem, size = 0x8000, scoped, tag = 'output window, operand 0, single buffered']
    #allocation10 [shape = 'u8[4096]{0}', space=vmem, size = 0x1000, scoped, tag = 'output window, operand 1, single buffered']
    #allocation11 [shape = 's32[1]{0}', space=sflag, size = 0x4, scoped, tag = 'scoped memory for tpu_custom_call.1']
    #allocation12 [shape = 'u8[4096]{0}', space=vmem, size = 0x1000, scoped, tag = 'output window, operand 2, single buffered']
    %18 = vsyncpa [#allocation7], 0
    %19 = vsyncpa [#allocation8], 0
    %20 = vsyncpa [#allocation11], 0
    // Predicated region
    $region2: #{tpu_custom_call.1} parent=1 // pred_check
      _
    $region3: #{tpu_custom_call.1} parent=1 // pred_check_branch
      %22 = sbr.rel (0) target = $region5
    $region4: #{tpu_custom_call.1} parent=1 // pred_region
      _
    $region5: #{tpu_custom_call.1} parent=1 // pred_fallthru
      _
    // Predicated region
    $region6: #{tpu_custom_call.1} parent=1 // pred_check
      _
    $region7: #{tpu_custom_call.1} parent=1 // pred_check_branch
      %24 = sbr.rel (0) target = $region9
    $region8: #{tpu_custom_call.1} parent=1 // pred_region
      _
    $region9: #{tpu_custom_call.1} parent=1 // pred_fallthru
      _
    // Predicated region
    $region10: #{tpu_custom_call.1} parent=1 // pred_check
      _
    $region11: #{tpu_custom_call.1} parent=1 // pred_check_branch
      %26 = sbr.rel (0) target = $region13
    $region12: #{tpu_custom_call.1} parent=1 // pred_region
      _
    $region13: #{tpu_custom_call.1} parent=1 // pred_fallthru
      _
    // Predicated region
    $region14: #{tpu_custom_call.1} parent=1 // pred_check
      _
    $region15: #{tpu_custom_call.1} parent=1 // pred_check_branch
      %28 = sbr.rel (0) target = $region17
    $region16: #{tpu_custom_call.1} parent=1 // pred_region
      _
    $region17: #{tpu_custom_call.1} parent=1 // pred_fallthru
      _
    // Predicated region
    $region18: #{tpu_custom_call.1} parent=1 // pred_check
      _
    $region19: #{tpu_custom_call.1} parent=1 // pred_check_branch
      %30 = sbr.rel (0) target = $region21
    $region20: #{tpu_custom_call.1} parent=1 // pred_region
      %s32 = ssub.s32 8192, 8192
      %33 = vsyncadd [#allocation7], %s32
      %s34 = sshll.u32 [#allocation6], 4
      %s35 = int_to_ptr.vmem [resolvable:$true] %s34
      %40 = dma.hbm_to_vmem [thread:$0]  %s4, 8192, %s35, [#allocation7], 512, 512, 32
    $region21: #{tpu_custom_call.1} parent=1 // pred_fallthru
      _
    // Predicated region
    $region22: #{tpu_custom_call.1} parent=1 // pred_check
      _
    $region23: #{tpu_custom_call.1} parent=1 // pred_check_branch
      %42 = sbr.rel (0) target = $region25
    $region24: #{tpu_custom_call.1} parent=1 // pred_region
      _
    $region25: #{tpu_custom_call.1} parent=1 // pred_fallthru
      _
    // Predicated region
    $region26: #{tpu_custom_call.1} parent=1 // pred_check
      _
    $region27: #{tpu_custom_call.1} parent=1 // pred_check_branch
      %44 = sbr.rel (0) target = $region29
    $region28: #{tpu_custom_call.1} parent=1 // pred_region
      _
    $region29: #{tpu_custom_call.1} parent=1 // pred_fallthru
      _
    // Predicated region
    $region30: #{tpu_custom_call.1} parent=1 // pred_check
      _
    $region31: #{tpu_custom_call.1} parent=1 // pred_check_branch
      %46 = sbr.rel (0) target = $region33
    $region32: #{tpu_custom_call.1} parent=1 // pred_region
      _
    $region33: #{tpu_custom_call.1} parent=1 // pred_fallthru
      _
    // Predicated region
    $region34: #{tpu_custom_call.1} parent=1 // pred_check
      _
    $region35: #{tpu_custom_call.1} parent=1 // pred_check_branch
      %48 = sbr.rel (0) target = $region37
    $region36: #{tpu_custom_call.1} parent=1 // pred_region
      _
    $region37: #{tpu_custom_call.1} parent=1 // pred_fallthru
      _
    // Predicated region
    $region38: #{tpu_custom_call.1} parent=1 // pred_check
      _
    $region39: #{tpu_custom_call.1} parent=1 // pred_check_branch
      %50 = sbr.rel (0) target = $region41
    $region40: #{tpu_custom_call.1} parent=1 // pred_region
      _
    $region41: #{tpu_custom_call.1} parent=1 // pred_fallthru
      _
    // Predicated region
    $region42: #{tpu_custom_call.1} parent=1 // pred_check
      _
    $region43: #{tpu_custom_call.1} parent=1 // pred_check_branch
      %52 = sbr.rel (0) target = $region45
    $region44: #{tpu_custom_call.1} parent=1 // pred_region
      %53 = dma.done [#allocation7], 8192
    $region45: #{tpu_custom_call.1} parent=1 // pred_fallthru
      _
    %p54 = scmp.eq.s32.totalorder 0, 0
    // Predicated region
    $region46: #{tpu_custom_call.1} parent=1 // pred_check
      %p55 = pneg %p54
    $region47: #{tpu_custom_call.1} parent=1 // pred_check_branch
      %57 = sbr.rel (%p55) target = $region49
    $region48: #{tpu_custom_call.1} parent=1 // pred_region
      %v58 = vld [vmem:[%s1] sm:$0xff]
      %59 = vst [vmem:[#allocation2] sm:$0xff] %v58
      %v60 = vld [vmem:[%s2] sm:$0xff]
      %61 = vst [vmem:[#allocation3] sm:$0xff] %v60
    $region49: #{tpu_custom_call.1} parent=1 // pred_fallthru
      _
    %v62 = vld [vmem:[%s0] sm:$0xff]
    %v63 = vld [vmem:[%s0 + $0x8] sm:$0xff]
    %v64 = vld [vmem:[%s0 + $0x10] sm:$0xff]
    %v65 = vld [vmem:[%s0 + $0x18] sm:$0xff]
    %v66 = vld [vmem:[%s0 + $0x20] sm:$0xff]
    %v67 = vld [vmem:[%s0 + $0x28] sm:$0xff]
    %v68 = vld [vmem:[%s0 + $0x30] sm:$0xff]
    %v69 = vld [vmem:[%s0 + $0x38] sm:$0xff]
    %v70 = vld [vmem:[%s3] sm:$0xff]
    %v71 = vld [vmem:[%s3 + $0x8] sm:$0xff]
    %v72 = vld [vmem:[%s3 + $0x10] sm:$0xff]
    %v73 = vld [vmem:[%s3 + $0x18] sm:$0xff]
    %v74 = vld [vmem:[%s3 + $0x20] sm:$0xff]
    %v75 = vld [vmem:[%s3 + $0x28] sm:$0xff]
    %v76 = vld [vmem:[%s3 + $0x30] sm:$0xff]
    %v77 = vld [vmem:[%s3 + $0x38] sm:$0xff]
    %v78 = vld [vmem:[%s5] sm:$0xf]
    %v80 = vlaneseq
    %v81 = vshrl.u32 %v80, 7
    %v82 = vsub.s32 0, %v81
    %v83 = vrot.slane %v78, %v82
    %v84 = vlaneseq
    %v85 = vshrl.u32 %v84, 7
    %v86 = vsub.s32 1, %v85
    %v87 = vrot.slane %v78, %v86
    %v88 = vlaneseq
    %v89 = vshrl.u32 %v88, 7
    %v90 = vsub.s32 2, %v89
    %v91 = vrot.slane %v78, %v90
    %v92 = vlaneseq
    %v93 = vshrl.u32 %v92, 7
    %v94 = vsub.s32 3, %v93
    %v95 = vrot.slane %v78, %v94
    %vm100 = vcmask 130048
    %v102 = vsel %vm100, %v62, 0
    %v105 = vsel %vm100, %v63, 0
    %v108 = vsel %vm100, %v64, 0
    %v111 = vsel %vm100, %v65, 0
    %v114 = vsel %vm100, %v66, 0
    %v117 = vsel %vm100, %v67, 0
    %v120 = vsel %vm100, %v68, 0
    %v123 = vsel %vm100, %v69, 0
    %125 = vmatprep.subr.mxu0 %v71
    %126 = vmatpush1.msra.mxu0 %v70
    %127 = vmatprep.subr.mxu0 %v75
    %128 = vmatpush1.msra.mxu0 %v74
    %129 = vmatprep.subr.mxu0 0.0
    %130 = vmatpush1.msra.mxu0 0.0
    %131 = vmatprep.subr.mxu0 0.0
    %132 = vmatpush1.msra.mxu0 0.0
    %133 = vmatprep.subr.mxu0 0.0
    %134 = vmatpush1.msra.mxu0 0.0
    %135 = vmatprep.subr.mxu0 0.0
    %136 = vmatpush1.msra.mxu0 0.0
    %137 = vmatprep.subr.mxu0 0.0
    %138 = vmatpush1.msra.mxu0 0.0
    %139 = vmatprep.subr.mxu0 0.0
    %140 = vmatpush1.msra.mxu0 0.0
    %141 = vmatprep.subr.mxu0 0.0
    %142 = vmatpush1.msra.mxu0 0.0
    %143 = vmatprep.subr.mxu0 0.0
    %144 = vmatpush1.msra.mxu0 0.0
    %145 = vmatprep.subr.mxu0 0.0
    %146 = vmatpush1.msra.mxu0 0.0
    %147 = vmatprep.subr.mxu0 0.0
    %148 = vmatpush1.msra.mxu0 0.0
    %149 = vmatprep.subr.mxu0 0.0
    %150 = vmatpush1.msra.mxu0 0.0
    %151 = vmatprep.subr.mxu0 0.0
    %152 = vmatpush1.msra.mxu0 0.0
    %153 = vmatprep.subr.mxu0 0.0
    %154 = vmatpush1.msra.mxu0 0.0
    %155 = vmatprep.subr.mxu0 0.0
    %156 = vmatpush1.msra.mxu0 0.0
    %157 = vmatprep.subr.mxu0 0.0
    %158 = vmatpush1.msra.mxu0 0.0
    %159 = vmatprep.subr.mxu0 0.0
    %160 = vmatpush1.msra.mxu0 0.0
    %161 = vmatprep.subr.mxu0 0.0
    %162 = vmatpush1.msra.mxu0 0.0
    %163 = vmatprep.subr.mxu0 0.0
    %164 = vmatpush1.msra.mxu0 0.0
    %165 = vmatprep.subr.mxu0 0.0
    %166 = vmatpush1.msra.mxu0 0.0
    %167 = vmatprep.subr.mxu0 0.0
    %168 = vmatpush1.msra.mxu0 0.0
    %169 = vmatprep.subr.mxu0 0.0
    %170 = vmatpush1.msra.mxu0 0.0
    %171 = vmatprep.subr.mxu0 0.0
    %172 = vmatpush1.msra.mxu0 0.0
    %173 = vmatprep.subr.mxu0 0.0
    %174 = vmatpush1.msra.mxu0 0.0
    %175 = vmatprep.subr.mxu0 0.0
    %176 = vmatpush1.msra.mxu0 0.0
    %177 = vmatprep.subr.mxu0 0.0
    %178 = vmatpush1.msra.mxu0 0.0
    %179 = vmatprep.subr.mxu0 0.0
    %180 = vmatpush1.msra.mxu0 0.0
    %181 = vmatprep.subr.mxu0 0.0
    %182 = vmatpush1.msra.mxu0 0.0
    %183 = vmatprep.subr.mxu0 0.0
    %184 = vmatpush1.msra.mxu0 0.0
    %185 = vmatprep.subr.mxu0 0.0
    %186 = vmatpush1.msra.mxu0 0.0
    %187 = vmatprep.subr.mxu0 0.0
    %188 = vmatpush1.msra.mxu0 0.0
    %189 = vmatprep.mubr.f32.mxu0 0.0
    %190 = vmatmul.mubr.f32.gmra.mrb[0].mxu0 %v102
    %v191 = vpop.f32.mrb[0].mxu0
    %v192 = vadd.f32 %v83, %v191
    %v193 = vpop.f32.mrb[0].mxu0
    %v194 = vadd.f32 %v87, %v193
    %195 = vmatprep.mubr.f32.mxu0 0.0
    %196 = vmatmul.mubr.f32.gmra.mrb[0].mxu0 %v105
    %v197 = vpop.f32.mrb[0].mxu0
    %v198 = vadd.f32 %v83, %v197
    %v199 = vpop.f32.mrb[0].mxu0
    %v200 = vadd.f32 %v87, %v199
    %201 = vmatprep.mubr.f32.mxu0 0.0
    %202 = vmatmul.mubr.f32.gmra.mrb[0].mxu0 %v108
    %v203 = vpop.f32.mrb[0].mxu0
    %v204 = vadd.f32 %v83, %v203
    %v205 = vpop.f32.mrb[0].mxu0
    %v206 = vadd.f32 %v87, %v205
    %207 = vmatprep.mubr.f32.mxu0 0.0
    %208 = vmatmul.mubr.f32.gmra.mrb[0].mxu0 %v111
    %v209 = vpop.f32.mrb[0].mxu0
    %v210 = vadd.f32 %v83, %v209
    %v211 = vpop.f32.mrb[0].mxu0
    %v212 = vadd.f32 %v87, %v211
    %213 = vmatprep.mubr.f32.mxu0 0.0
    %214 = vmatmul.mubr.f32.gmra.mrb[0].mxu0 %v114
    %v215 = vpop.f32.mrb[0].mxu0
    %v216 = vadd.f32 %v83, %v215
    %v217 = vpop.f32.mrb[0].mxu0
    %v218 = vadd.f32 %v87, %v217
    %219 = vmatprep.mubr.f32.mxu0 0.0
    %220 = vmatmul.mubr.f32.gmra.mrb[0].mxu0 %v117
    %v221 = vpop.f32.mrb[0].mxu0
    %v222 = vadd.f32 %v83, %v221
    %v223 = vpop.f32.mrb[0].mxu0
    %v224 = vadd.f32 %v87, %v223
    %225 = vmatprep.mubr.f32.mxu0 0.0
    %226 = vmatmul.mubr.f32.gmra.mrb[0].mxu0 %v120
    %v227 = vpop.f32.mrb[0].mxu0
    %v228 = vadd.f32 %v83, %v227
    %v229 = vpop.f32.mrb[0].mxu0
    %v230 = vadd.f32 %v87, %v229
    %231 = vmatprep.mubr.f32.mxu0 0.0
    %232 = vmatmul.mubr.f32.gmra.mrb[0].mxu0 %v123
    %v233 = vpop.f32.mrb[0].mxu0
    %v234 = vadd.f32 %v83, %v233
    %v235 = vpop.f32.mrb[0].mxu0
    %v236 = vadd.f32 %v87, %v235
    %237 = vdwg.mxu0
    %238 = vmatprep.subr.mxu0 %v73
    %239 = vmatpush1.msra.mxu0 %v72
    %240 = vmatprep.subr.mxu0 %v77
    %241 = vmatpush1.msra.mxu0 %v76
    %242 = vmatprep.subr.mxu0 0.0
    %243 = vmatpush1.msra.mxu0 0.0
    %244 = vmatprep.subr.mxu0 0.0
    %245 = vmatpush1.msra.mxu0 0.0
    %246 = vmatprep.subr.mxu0 0.0
    %247 = vmatpush1.msra.mxu0 0.0
    %248 = vmatprep.subr.mxu0 0.0
    %249 = vmatpush1.msra.mxu0 0.0
    %250 = vmatprep.subr.mxu0 0.0
    %251 = vmatpush1.msra.mxu0 0.0
    %252 = vmatprep.subr.mxu0 0.0
    %253 = vmatpush1.msra.mxu0 0.0
    %254 = vmatprep.subr.mxu0 0.0
    %255 = vmatpush1.msra.mxu0 0.0
    %256 = vmatprep.subr.mxu0 0.0
    %257 = vmatpush1.msra.mxu0 0.0
    %258 = vmatprep.subr.mxu0 0.0
    %259 = vmatpush1.msra.mxu0 0.0
    %260 = vmatprep.subr.mxu0 0.0
    %261 = vmatpush1.msra.mxu0 0.0
    %262 = vmatprep.subr.mxu0 0.0
    %263 = vmatpush1.msra.mxu0 0.0
    %264 = vmatprep.subr.mxu0 0.0
    %265 = vmatpush1.msra.mxu0 0.0
    %266 = vmatprep.subr.mxu0 0.0
    %267 = vmatpush1.msra.mxu0 0.0
    %268 = vmatprep.subr.mxu0 0.0
    %269 = vmatpush1.msra.mxu0 0.0
    %270 = vmatprep.subr.mxu0 0.0
    %271 = vmatpush1.msra.mxu0 0.0
    %272 = vmatprep.subr.mxu0 0.0
    %273 = vmatpush1.msra.mxu0 0.0
    %274 = vmatprep.subr.mxu0 0.0
    %275 = vmatpush1.msra.mxu0 0.0
    %276 = vmatprep.subr.mxu0 0.0
    %277 = vmatpush1.msra.mxu0 0.0
    %278 = vmatprep.subr.mxu0 0.0
    %279 = vmatpush1.msra.mxu0 0.0
    %280 = vmatprep.subr.mxu0 0.0
    %281 = vmatpush1.msra.mxu0 0.0
    %282 = vmatprep.subr.mxu0 0.0
    %283 = vmatpush1.msra.mxu0 0.0
    %284 = vmatprep.subr.mxu0 0.0
    %285 = vmatpush1.msra.mxu0 0.0
    %286 = vmatprep.subr.mxu0 0.0
    %287 = vmatpush1.msra.mxu0 0.0
    %288 = vmatprep.subr.mxu0 0.0
    %289 = vmatpush1.msra.mxu0 0.0
    %290 = vmatprep.subr.mxu0 0.0
    %291 = vmatpush1.msra.mxu0 0.0
    %292 = vmatprep.subr.mxu0 0.0
    %293 = vmatpush1.msra.mxu0 0.0
    %294 = vmatprep.subr.mxu0 0.0
    %295 = vmatpush1.msra.mxu0 0.0
    %296 = vmatprep.subr.mxu0 0.0
    %297 = vmatpush1.msra.mxu0 0.0
    %298 = vmatprep.subr.mxu0 0.0
    %299 = vmatpush1.msra.mxu0 0.0
    %300 = vmatprep.subr.mxu0 0.0
    %301 = vmatpush1.msra.mxu0 0.0
    %302 = vmatprep.mubr.f32.mxu0 0.0
    %303 = vmatmul.mubr.f32.gmra.mrb[0].mxu0 %v102
    %v304 = vpop.f32.mrb[0].mxu0
    %v305 = vadd.f32 %v91, %v304
    %v306 = vpop.f32.mrb[0].mxu0
    %v307 = vadd.f32 %v95, %v306
    %308 = vmatprep.mubr.f32.mxu0 0.0
    %309 = vmatmul.mubr.f32.gmra.mrb[0].mxu0 %v105
    %v310 = vpop.f32.mrb[0].mxu0
    %v311 = vadd.f32 %v91, %v310
    %v312 = vpop.f32.mrb[0].mxu0
    %v313 = vadd.f32 %v95, %v312
    %314 = vmatprep.mubr.f32.mxu0 0.0
    %315 = vmatmul.mubr.f32.gmra.mrb[0].mxu0 %v108
    %v316 = vpop.f32.mrb[0].mxu0
    %v317 = vadd.f32 %v91, %v316
    %v318 = vpop.f32.mrb[0].mxu0
    %v319 = vadd.f32 %v95, %v318
    %320 = vmatprep.mubr.f32.mxu0 0.0
    %321 = vmatmul.mubr.f32.gmra.mrb[0].mxu0 %v111
    %v322 = vpop.f32.mrb[0].mxu0
    %v323 = vadd.f32 %v91, %v322
    %v324 = vpop.f32.mrb[0].mxu0
    %v325 = vadd.f32 %v95, %v324
    %326 = vmatprep.mubr.f32.mxu0 0.0
    %327 = vmatmul.mubr.f32.gmra.mrb[0].mxu0 %v114
    %v328 = vpop.f32.mrb[0].mxu0
    %v329 = vadd.f32 %v91, %v328
    %v330 = vpop.f32.mrb[0].mxu0
    %v331 = vadd.f32 %v95, %v330
    %332 = vmatprep.mubr.f32.mxu0 0.0
    %333 = vmatmul.mubr.f32.gmra.mrb[0].mxu0 %v117
    %v334 = vpop.f32.mrb[0].mxu0
    %v335 = vadd.f32 %v91, %v334
    %v336 = vpop.f32.mrb[0].mxu0
    %v337 = vadd.f32 %v95, %v336
    %338 = vmatprep.mubr.f32.mxu0 0.0
    %339 = vmatmul.mubr.f32.gmra.mrb[0].mxu0 %v120
    %v340 = vpop.f32.mrb[0].mxu0
    %v341 = vadd.f32 %v91, %v340
    %v342 = vpop.f32.mrb[0].mxu0
    %v343 = vadd.f32 %v95, %v342
    %344 = vmatprep.mubr.f32.mxu0 0.0
    %345 = vmatmul.mubr.f32.gmra.mrb[0].mxu0 %v123
    %v346 = vpop.f32.mrb[0].mxu0
    %v347 = vadd.f32 %v91, %v346
    %v348 = vpop.f32.mrb[0].mxu0
    %v349 = vadd.f32 %v95, %v348
    %350 = vdwg.mxu0
    %351 = vst [vmem:[#allocation4] sm:$0xff] %v192
    %352 = vst [vmem:[#allocation4 + $0x8] sm:$0xff] %v194
    %353 = vst [vmem:[#allocation4 + $0x10] sm:$0xff] %v305
    %354 = vst [vmem:[#allocation4 + $0x18] sm:$0xff] %v307
    %355 = vst [vmem:[#allocation4 + $0x20] sm:$0xff] %v198
    %356 = vst [vmem:[#allocation4 + $0x28] sm:$0xff] %v200
    %357 = vst [vmem:[#allocation4 + $0x30] sm:$0xff] %v311
    %358 = vst [vmem:[#allocation4 + $0x38] sm:$0xff] %v313
    %359 = vst [vmem:[#allocation4 + $0x40] sm:$0xff] %v204
    %360 = vst [vmem:[#allocation4 + $0x48] sm:$0xff] %v206
    %361 = vst [vmem:[#allocation4 + $0x50] sm:$0xff] %v317
    %362 = vst [vmem:[#allocation4 + $0x58] sm:$0xff] %v319
    %363 = vst [vmem:[#allocation4 + $0x60] sm:$0xff] %v210
    %364 = vst [vmem:[#allocation4 + $0x68] sm:$0xff] %v212
    %365 = vst [vmem:[#allocation4 + $0x70] sm:$0xff] %v323
    %366 = vst [vmem:[#allocation4 + $0x78] sm:$0xff] %v325
    %367 = vst [vmem:[#allocation4 + $0x80] sm:$0xff] %v216
    %368 = vst [vmem:[#allocation4 + $0x88] sm:$0xff] %v218
    %369 = vst [vmem:[#allocation4 + $0x90] sm:$0xff] %v329
    %370 = vst [vmem:[#allocation4 + $0x98] sm:$0xff] %v331
    %371 = vst [vmem:[#allocation4 + $0xa0] sm:$0xff] %v222
    %372 = vst [vmem:[#allocation4 + $0xa8] sm:$0xff] %v224
    %373 = vst [vmem:[#allocation4 + $0xb0] sm:$0xff] %v335
    %374 = vst [vmem:[#allocation4 + $0xb8] sm:$0xff] %v337
    %375 = vst [vmem:[#allocation4 + $0xc0] sm:$0xff] %v228
    %376 = vst [vmem:[#allocation4 + $0xc8] sm:$0xff] %v230
    %377 = vst [vmem:[#allocation4 + $0xd0] sm:$0xff] %v341
    %378 = vst [vmem:[#allocation4 + $0xd8] sm:$0xff] %v343
    %379 = vst [vmem:[#allocation4 + $0xe0] sm:$0xff] %v234
    %380 = vst [vmem:[#allocation4 + $0xe8] sm:$0xff] %v236
    %381 = vst [vmem:[#allocation4 + $0xf0] sm:$0xff] %v347
    %382 = vst [vmem:[#allocation4 + $0xf8] sm:$0xff] %v349
    %v383 = vld [vmem:[#allocation6] sm:$0xff]
    %v384 = vld [vmem:[#allocation6 + $0x8] sm:$0xff]
    %v385 = vld [vmem:[#allocation6 + $0x10] sm:$0xff]
    %v386 = vld [vmem:[#allocation6 + $0x18] sm:$0xff]
    %v387 = vld [vmem:[#allocation6 + $0x20] sm:$0xff]
    %v388 = vld [vmem:[#allocation6 + $0x28] sm:$0xff]
    %v389 = vld [vmem:[#allocation6 + $0x30] sm:$0xff]
    %v390 = vld [vmem:[#allocation6 + $0x38] sm:$0xff]
    %v391 = vld [vmem:[#allocation6 + $0x40] sm:$0xff]
    %v392 = vld [vmem:[#allocation6 + $0x48] sm:$0xff]
    %v393 = vld [vmem:[#allocation6 + $0x50] sm:$0xff]
    %v394 = vld [vmem:[#allocation6 + $0x58] sm:$0xff]
    %v395 = vld [vmem:[#allocation6 + $0x60] sm:$0xff]
    %v396 = vld [vmem:[#allocation6 + $0x68] sm:$0xff]
    %v397 = vld [vmem:[#allocation6 + $0x70] sm:$0xff]
    %v398 = vld [vmem:[#allocation6 + $0x78] sm:$0xff]
    %v399 = vld [vmem:[#allocation6 + $0x80] sm:$0xff]
    %v400 = vld [vmem:[#allocation6 + $0x88] sm:$0xff]
    %v401 = vld [vmem:[#allocation6 + $0x90] sm:$0xff]
    %v402 = vld [vmem:[#allocation6 + $0x98] sm:$0xff]
    %v403 = vld [vmem:[#allocation6 + $0xa0] sm:$0xff]
    %v404 = vld [vmem:[#allocation6 + $0xa8] sm:$0xff]
    %v405 = vld [vmem:[#allocation6 + $0xb0] sm:$0xff]
    %v406 = vld [vmem:[#allocation6 + $0xb8] sm:$0xff]
    %v407 = vld [vmem:[#allocation6 + $0xc0] sm:$0xff]
    %v408 = vld [vmem:[#allocation6 + $0xc8] sm:$0xff]
    %v409 = vld [vmem:[#allocation6 + $0xd0] sm:$0xff]
    %v410 = vld [vmem:[#allocation6 + $0xd8] sm:$0xff]
    %v411 = vld [vmem:[#allocation6 + $0xe0] sm:$0xff]
    %v412 = vld [vmem:[#allocation6 + $0xe8] sm:$0xff]
    %v413 = vld [vmem:[#allocation6 + $0xf0] sm:$0xff]
    %v414 = vld [vmem:[#allocation6 + $0xf8] sm:$0xff]
    %v415 = vld [vmem:[#allocation6 + $0x100] sm:$0xff]
    %v416 = vld [vmem:[#allocation6 + $0x108] sm:$0xff]
    %v417 = vld [vmem:[#allocation6 + $0x110] sm:$0xff]
    %v418 = vld [vmem:[#allocation6 + $0x118] sm:$0xff]
    %v419 = vld [vmem:[#allocation6 + $0x120] sm:$0xff]
    %v420 = vld [vmem:[#allocation6 + $0x128] sm:$0xff]
    %v421 = vld [vmem:[#allocation6 + $0x130] sm:$0xff]
    %v422 = vld [vmem:[#allocation6 + $0x138] sm:$0xff]
    %v423 = vld [vmem:[#allocation6 + $0x140] sm:$0xff]
    %v424 = vld [vmem:[#allocation6 + $0x148] sm:$0xff]
    %v425 = vld [vmem:[#allocation6 + $0x150] sm:$0xff]
    %v426 = vld [vmem:[#allocation6 + $0x158] sm:$0xff]
    %v427 = vld [vmem:[#allocation6 + $0x160] sm:$0xff]
    %v428 = vld [vmem:[#allocation6 + $0x168] sm:$0xff]
    %v429 = vld [vmem:[#allocation6 + $0x170] sm:$0xff]
    %v430 = vld [vmem:[#allocation6 + $0x178] sm:$0xff]
    %v431 = vld [vmem:[#allocation6 + $0x180] sm:$0xff]
    %v432 = vld [vmem:[#allocation6 + $0x188] sm:$0xff]
    %v433 = vld [vmem:[#allocation6 + $0x190] sm:$0xff]
    %v434 = vld [vmem:[#allocation6 + $0x198] sm:$0xff]
    %v435 = vld [vmem:[#allocation6 + $0x1a0] sm:$0xff]
    %v436 = vld [vmem:[#allocation6 + $0x1a8] sm:$0xff]
    %v437 = vld [vmem:[#allocation6 + $0x1b0] sm:$0xff]
    %v438 = vld [vmem:[#allocation6 + $0x1b8] sm:$0xff]
    %v439 = vld [vmem:[#allocation6 + $0x1c0] sm:$0xff]
    %v440 = vld [vmem:[#allocation6 + $0x1c8] sm:$0xff]
    %v441 = vld [vmem:[#allocation6 + $0x1d0] sm:$0xff]
    %v442 = vld [vmem:[#allocation6 + $0x1d8] sm:$0xff]
    %v443 = vld [vmem:[#allocation6 + $0x1e0] sm:$0xff]
    %v444 = vld [vmem:[#allocation6 + $0x1e8] sm:$0xff]
    %v445 = vld [vmem:[#allocation6 + $0x1f0] sm:$0xff]
    %v446 = vld [vmem:[#allocation6 + $0x1f8] sm:$0xff]
    %v447 = vld [vmem:[#allocation2] sm:$0xff]
    %v448 = vld [vmem:[#allocation3] sm:$0xff]
    %v449 = vld [vmem:[#allocation4] sm:$0xff]
    %v450 = vld [vmem:[#allocation4 + $0x8] sm:$0xff]
    %v451 = vld [vmem:[#allocation4 + $0x10] sm:$0xff]
    %v452 = vld [vmem:[#allocation4 + $0x18] sm:$0xff]
    %453 = vmatprep.subr.mxu0 %v384
    %454 = vmatpush1.msra.mxu0 %v383
    %455 = vmatprep.subr.mxu0 %v388
    %456 = vmatpush1.msra.mxu0 %v387
    %457 = vmatprep.subr.mxu0 %v392
    %458 = vmatpush1.msra.mxu0 %v391
    %459 = vmatprep.subr.mxu0 %v396
    %460 = vmatpush1.msra.mxu0 %v395
    %461 = vmatprep.subr.mxu0 %v400
    %462 = vmatpush1.msra.mxu0 %v399
    %463 = vmatprep.subr.mxu0 %v404
    %464 = vmatpush1.msra.mxu0 %v403
    %465 = vmatprep.subr.mxu0 %v408
    %466 = vmatpush1.msra.mxu0 %v407
    %467 = vmatprep.subr.mxu0 %v412
    %468 = vmatpush1.msra.mxu0 %v411
    %469 = vmatprep.subr.mxu0 %v416
    %470 = vmatpush1.msra.mxu0 %v415
    %471 = vmatprep.subr.mxu0 %v420
    %472 = vmatpush1.msra.mxu0 %v419
    %473 = vmatprep.subr.mxu0 %v424
    %474 = vmatpush1.msra.mxu0 %v423
    %475 = vmatprep.subr.mxu0 %v428
    %476 = vmatpush1.msra.mxu0 %v427
    %477 = vmatprep.subr.mxu0 %v432
    %478 = vmatpush1.msra.mxu0 %v431
    %479 = vmatprep.subr.mxu0 %v436
    %480 = vmatpush1.msra.mxu0 %v435
    %481 = vmatprep.subr.mxu0 %v440
    %482 = vmatpush1.msra.mxu0 %v439
    %483 = vmatprep.subr.mxu0 %v444
    %484 = vmatpush1.msra.mxu0 %v443
    %485 = vmatprep.subr.mxu0 0.0
    %486 = vmatpush1.msra.mxu0 0.0
    %487 = vmatprep.subr.mxu0 0.0
    %488 = vmatpush1.msra.mxu0 0.0
    %489 = vmatprep.subr.mxu0 0.0
    %490 = vmatpush1.msra.mxu0 0.0
    %491 = vmatprep.subr.mxu0 0.0
    %492 = vmatpush1.msra.mxu0 0.0
    %493 = vmatprep.subr.mxu0 0.0
    %494 = vmatpush1.msra.mxu0 0.0
    %495 = vmatprep.subr.mxu0 0.0
    %496 = vmatpush1.msra.mxu0 0.0
    %497 = vmatprep.subr.mxu0 0.0
    %498 = vmatpush1.msra.mxu0 0.0
    %499 = vmatprep.subr.mxu0 0.0
    %500 = vmatpush1.msra.mxu0 0.0
    %501 = vmatprep.subr.mxu0 0.0
    %502 = vmatpush1.msra.mxu0 0.0
    %503 = vmatprep.subr.mxu0 0.0
    %504 = vmatpush1.msra.mxu0 0.0
    %505 = vmatprep.subr.mxu0 0.0
    %506 = vmatpush1.msra.mxu0 0.0
    %507 = vmatprep.subr.mxu0 0.0
    %508 = vmatpush1.msra.mxu0 0.0
    %509 = vmatprep.subr.mxu0 0.0
    %510 = vmatpush1.msra.mxu0 0.0
    %511 = vmatprep.subr.mxu0 0.0
    %512 = vmatpush1.msra.mxu0 0.0
    %513 = vmatprep.subr.mxu0 0.0
    %514 = vmatpush1.msra.mxu0 0.0
    %515 = vmatprep.subr.mxu0 0.0
    %516 = vmatpush1.msra.mxu0 0.0
    %517 = vmatprep.mubr.f32.mxu0 0.0
    %518 = vmatmul.mubr.f32.gmra.mrb[0].mxu0 %v447
    %v519 = vpop.f32.mrb[0].mxu0
    %v520 = vadd.f32 0.0, %v519
    %v521 = vpop.f32.mrb[0].mxu0
    %v522 = vadd.f32 0.0, %v521
    %523 = vdwg.mxu0
    %524 = vmatprep.subr.mxu0 %v386
    %525 = vmatpush1.msra.mxu0 %v385
    %526 = vmatprep.subr.mxu0 %v390
    %527 = vmatpush1.msra.mxu0 %v389
    %528 = vmatprep.subr.mxu0 %v394
    %529 = vmatpush1.msra.mxu0 %v393
    %530 = vmatprep.subr.mxu0 %v398
    %531 = vmatpush1.msra.mxu0 %v397
    %532 = vmatprep.subr.mxu0 %v402
    %533 = vmatpush1.msra.mxu0 %v401
    %534 = vmatprep.subr.mxu0 %v406
    %535 = vmatpush1.msra.mxu0 %v405
    %536 = vmatprep.subr.mxu0 %v410
    %537 = vmatpush1.msra.mxu0 %v409
    %538 = vmatprep.subr.mxu0 %v414
    %539 = vmatpush1.msra.mxu0 %v413
    %540 = vmatprep.subr.mxu0 %v418
    %541 = vmatpush1.msra.mxu0 %v417
    %542 = vmatprep.subr.mxu0 %v422
    %543 = vmatpush1.msra.mxu0 %v421
    %544 = vmatprep.subr.mxu0 %v426
    %545 = vmatpush1.msra.mxu0 %v425
    %546 = vmatprep.subr.mxu0 %v430
    %547 = vmatpush1.msra.mxu0 %v429
    %548 = vmatprep.subr.mxu0 %v434
    %549 = vmatpush1.msra.mxu0 %v433
    %550 = vmatprep.subr.mxu0 %v438
    %551 = vmatpush1.msra.mxu0 %v437
    %552 = vmatprep.subr.mxu0 %v442
    %553 = vmatpush1.msra.mxu0 %v441
    %554 = vmatprep.subr.mxu0 %v446
    %555 = vmatpush1.msra.mxu0 %v445
    %556 = vmatprep.subr.mxu0 0.0
    %557 = vmatpush1.msra.mxu0 0.0
    %558 = vmatprep.subr.mxu0 0.0
    %559 = vmatpush1.msra.mxu0 0.0
    %560 = vmatprep.subr.mxu0 0.0
    %561 = vmatpush1.msra.mxu0 0.0
    %562 = vmatprep.subr.mxu0 0.0
    %563 = vmatpush1.msra.mxu0 0.0
    %564 = vmatprep.subr.mxu0 0.0
    %565 = vmatpush1.msra.mxu0 0.0
    %566 = vmatprep.subr.mxu0 0.0
    %567 = vmatpush1.msra.mxu0 0.0
    %568 = vmatprep.subr.mxu0 0.0
    %569 = vmatpush1.msra.mxu0 0.0
    %570 = vmatprep.subr.mxu0 0.0
    %571 = vmatpush1.msra.mxu0 0.0
    %572 = vmatprep.subr.mxu0 0.0
    %573 = vmatpush1.msra.mxu0 0.0
    %574 = vmatprep.subr.mxu0 0.0
    %575 = vmatpush1.msra.mxu0 0.0
    %576 = vmatprep.subr.mxu0 0.0
    %577 = vmatpush1.msra.mxu0 0.0
    %578 = vmatprep.subr.mxu0 0.0
    %579 = vmatpush1.msra.mxu0 0.0
    %580 = vmatprep.subr.mxu0 0.0
    %581 = vmatpush1.msra.mxu0 0.0
    %582 = vmatprep.subr.mxu0 0.0
    %583 = vmatpush1.msra.mxu0 0.0
    %584 = vmatprep.subr.mxu0 0.0
    %585 = vmatpush1.msra.mxu0 0.0
    %586 = vmatprep.subr.mxu0 0.0
    %587 = vmatpush1.msra.mxu0 0.0
    %588 = vmatprep.mubr.f32.mxu0 0.0
    %589 = vmatmul.mubr.f32.gmra.mrb[0].mxu0 %v447
    %v590 = vpop.f32.mrb[0].mxu0
    %v591 = vadd.f32 0.0, %v590
    %v592 = vpop.f32.mrb[0].mxu0
    %v593 = vadd.f32 0.0, %v592
    %594 = vdwg.mxu0
    %v595 = vadd.f32 %v449, %v520
    %v596 = vadd.f32 %v450, %v522
    %v597 = vadd.f32 %v451, %v591
    %v598 = vadd.f32 %v452, %v593
    %v599 = vxor.u32 %v595, 2147483648
    %v600 = vxor.u32 %v596, 2147483648
    %v601 = vxor.u32 %v597, 2147483648
    %v602 = vmul.f32 %v599, 1.442695
    %v603 = vpow.pop %v602
    %v604 = vmul.f32 %v600, 1.442695
    %v605 = vpow.pop %v604
    %v606 = vmul.f32 %v601, 1.442695
    %v607 = vpow.pop %v606
    %v608 = vadd.f32 %v603, 1.0
    %v609 = vadd.f32 %v605, 1.0
    %v610 = vadd.f32 %v607, 1.0
    %v611 = vrcp.pop %v608
    %v612 = vmul.f32 1.0, %v611
    %v613 = vrcp.pop %v609
    %v614 = vmul.f32 1.0, %v613
    %v615 = vrcp.pop %v610
    %v616 = vmul.f32 1.0, %v615
    %v617 = vtanh.pop %v598
    %v618 = vmul.f32 %v614, %v448
    %v619 = vmul.f32 %v612, %v617
    %v620 = vadd.f32 %v618, %v619
    %v621 = vtanh.pop %v620
    %v622 = vmul.f32 %v616, %v621
    %623 = vst [vmem:[#allocation5] sm:$0xff] %v622
    %s624 = scalar_lea.vmem [#allocation4], 32
    %v625 = vld [vmem:[%s624] sm:$0xff]
    %v626 = vld [vmem:[%s624 + $0x8] sm:$0xff]
    %v627 = vld [vmem:[%s624 + $0x10] sm:$0xff]
    %v628 = vld [vmem:[%s624 + $0x18] sm:$0xff]
    %629 = vmatprep.subr.mxu0 %v384
    %630 = vmatpush1.msra.mxu0 %v383
    %631 = vmatprep.subr.mxu0 %v388
    %632 = vmatpush1.msra.mxu0 %v387
    %633 = vmatprep.subr.mxu0 %v392
    %634 = vmatpush1.msra.mxu0 %v391
    %635 = vmatprep.subr.mxu0 %v396
    %636 = vmatpush1.msra.mxu0 %v395
    %637 = vmatprep.subr.mxu0 %v400
    %638 = vmatpush1.msra.mxu0 %v399
    %639 = vmatprep.subr.mxu0 %v404
    %640 = vmatpush1.msra.mxu0 %v403
    %641 = vmatprep.subr.mxu0 %v408
    %642 = vmatpush1.msra.mxu0 %v407
    %643 = vmatprep.subr.mxu0 %v412
    %644 = vmatpush1.msra.mxu0 %v411
    %645 = vmatprep.subr.mxu0 %v416
    %646 = vmatpush1.msra.mxu0 %v415
    %647 = vmatprep.subr.mxu0 %v420
    %648 = vmatpush1.msra.mxu0 %v419
    %649 = vmatprep.subr.mxu0 %v424
    %650 = vmatpush1.msra.mxu0 %v423
    %651 = vmatprep.subr.mxu0 %v428
    %652 = vmatpush1.msra.mxu0 %v427
    %653 = vmatprep.subr.mxu0 %v432
    %654 = vmatpush1.msra.mxu0 %v431
    %655 = vmatprep.subr.mxu0 %v436
    %656 = vmatpush1.msra.mxu0 %v435
    %657 = vmatprep.subr.mxu0 %v440
    %658 = vmatpush1.msra.mxu0 %v439
    %659 = vmatprep.subr.mxu0 %v444
    %660 = vmatpush1.msra.mxu0 %v443
    %661 = vmatprep.subr.mxu0 0.0
    %662 = vmatpush1.msra.mxu0 0.0
    %663 = vmatprep.subr.mxu0 0.0
    %664 = vmatpush1.msra.mxu0 0.0
    %665 = vmatprep.subr.mxu0 0.0
    %666 = vmatpush1.msra.mxu0 0.0
    %667 = vmatprep.subr.mxu0 0.0
    %668 = vmatpush1.msra.mxu0 0.0
    %669 = vmatprep.subr.mxu0 0.0
    %670 = vmatpush1.msra.mxu0 0.0
    %671 = vmatprep.subr.mxu0 0.0
    %672 = vmatpush1.msra.mxu0 0.0
    %673 = vmatprep.subr.mxu0 0.0
    %674 = vmatpush1.msra.mxu0 0.0
    %675 = vmatprep.subr.mxu0 0.0
    %676 = vmatpush1.msra.mxu0 0.0
    %677 = vmatprep.subr.mxu0 0.0
    %678 = vmatpush1.msra.mxu0 0.0
    %679 = vmatprep.subr.mxu0 0.0
    %680 = vmatpush1.msra.mxu0 0.0
    %681 = vmatprep.subr.mxu0 0.0
    %682 = vmatpush1.msra.mxu0 0.0
    %683 = vmatprep.subr.mxu0 0.0
    %684 = vmatpush1.msra.mxu0 0.0
    %685 = vmatprep.subr.mxu0 0.0
    %686 = vmatpush1.msra.mxu0 0.0
    %687 = vmatprep.subr.mxu0 0.0
    %688 = vmatpush1.msra.mxu0 0.0
    %689 = vmatprep.subr.mxu0 0.0
    %690 = vmatpush1.msra.mxu0 0.0
    %691 = vmatprep.subr.mxu0 0.0
    %692 = vmatpush1.msra.mxu0 0.0
    %693 = vmatprep.mubr.f32.mxu0 0.0
    %694 = vmatmul.mubr.f32.gmra.mrb[0].mxu0 %v622
    %v695 = vpop.f32.mrb[0].mxu0
    %v696 = vadd.f32 0.0, %v695
    %v697 = vpop.f32.mrb[0].mxu0
    %v698 = vadd.f32 0.0, %v697
    %699 = vdwg.mxu0
    %700 = vmatprep.subr.mxu0 %v386
    %701 = vmatpush1.msra.mxu0 %v385
    %702 = vmatprep.subr.mxu0 %v390
    %703 = vmatpush1.msra.mxu0 %v389
    %704 = vmatprep.subr.mxu0 %v394
    %705 = vmatpush1.msra.mxu0 %v393
    %706 = vmatprep.subr.mxu0 %v398
    %707 = vmatpush1.msra.mxu0 %v397
    %708 = vmatprep.subr.mxu0 %v402
    %709 = vmatpush1.msra.mxu0 %v401
    %710 = vmatprep.subr.mxu0 %v406
    %711 = vmatpush1.msra.mxu0 %v405
    %712 = vmatprep.subr.mxu0 %v410
    %713 = vmatpush1.msra.mxu0 %v409
    %714 = vmatprep.subr.mxu0 %v414
    %715 = vmatpush1.msra.mxu0 %v413
    %716 = vmatprep.subr.mxu0 %v418
    %717 = vmatpush1.msra.mxu0 %v417
    %718 = vmatprep.subr.mxu0 %v422
    %719 = vmatpush1.msra.mxu0 %v421
    %720 = vmatprep.subr.mxu0 %v426
    %721 = vmatpush1.msra.mxu0 %v425
    %722 = vmatprep.subr.mxu0 %v430
    %723 = vmatpush1.msra.mxu0 %v429
    %724 = vmatprep.subr.mxu0 %v434
    %725 = vmatpush1.msra.mxu0 %v433
    %726 = vmatprep.subr.mxu0 %v438
    %727 = vmatpush1.msra.mxu0 %v437
    %728 = vmatprep.subr.mxu0 %v442
    %729 = vmatpush1.msra.mxu0 %v441
    %730 = vmatprep.subr.mxu0 %v446
    %731 = vmatpush1.msra.mxu0 %v445
    %732 = vmatprep.subr.mxu0 0.0
    %733 = vmatpush1.msra.mxu0 0.0
    %734 = vmatprep.subr.mxu0 0.0
    %735 = vmatpush1.msra.mxu0 0.0
    %736 = vmatprep.subr.mxu0 0.0
    %737 = vmatpush1.msra.mxu0 0.0
    %738 = vmatprep.subr.mxu0 0.0
    %739 = vmatpush1.msra.mxu0 0.0
    %740 = vmatprep.subr.mxu0 0.0
    %741 = vmatpush1.msra.mxu0 0.0
    %742 = vmatprep.subr.mxu0 0.0
    %743 = vmatpush1.msra.mxu0 0.0
    %744 = vmatprep.subr.mxu0 0.0
    %745 = vmatpush1.msra.mxu0 0.0
    %746 = vmatprep.subr.mxu0 0.0
    %747 = vmatpush1.msra.mxu0 0.0
    %748 = vmatprep.subr.mxu0 0.0
    %749 = vmatpush1.msra.mxu0 0.0
    %750 = vmatprep.subr.mxu0 0.0
    %751 = vmatpush1.msra.mxu0 0.0
    %752 = vmatprep.subr.mxu0 0.0
    %753 = vmatpush1.msra.mxu0 0.0
    %754 = vmatprep.subr.mxu0 0.0
    %755 = vmatpush1.msra.mxu0 0.0
    %756 = vmatprep.subr.mxu0 0.0
    %757 = vmatpush1.msra.mxu0 0.0
    %758 = vmatprep.subr.mxu0 0.0
    %759 = vmatpush1.msra.mxu0 0.0
    %760 = vmatprep.subr.mxu0 0.0
    %761 = vmatpush1.msra.mxu0 0.0
    %762 = vmatprep.subr.mxu0 0.0
    %763 = vmatpush1.msra.mxu0 0.0
    %764 = vmatprep.mubr.f32.mxu0 0.0
    %765 = vmatmul.mubr.f32.gmra.mrb[0].mxu0 %v622
    %v766 = vpop.f32.mrb[0].mxu0
    %v767 = vadd.f32 0.0, %v766
    %v768 = vpop.f32.mrb[0].mxu0
    %v769 = vadd.f32 0.0, %v768
    %770 = vdwg.mxu0
    %v771 = vadd.f32 %v625, %v696
    %v772 = vadd.f32 %v626, %v698
    %v773 = vadd.f32 %v627, %v767
    %v774 = vadd.f32 %v628, %v769
    %v775 = vxor.u32 %v771, 2147483648
    %v776 = vxor.u32 %v772, 2147483648
    %v777 = vxor.u32 %v773, 2147483648
    %v778 = vmul.f32 %v775, 1.442695
    %v779 = vpow.pop %v778
    %v780 = vmul.f32 %v776, 1.442695
    %v781 = vpow.pop %v780
    %v782 = vmul.f32 %v777, 1.442695
    %v783 = vpow.pop %v782
    %v784 = vadd.f32 %v779, 1.0
    %v785 = vadd.f32 %v781, 1.0
    %v786 = vadd.f32 %v783, 1.0
    %v787 = vrcp.pop %v784
    %v788 = vmul.f32 1.0, %v787
    %v789 = vrcp.pop %v785
    %v790 = vmul.f32 1.0, %v789
    %v791 = vrcp.pop %v786
    %v792 = vmul.f32 1.0, %v791
    %v793 = vtanh.pop %v774
    %v794 = vmul.f32 %v790, %v620
    %v795 = vmul.f32 %v788, %v793
    %v796 = vadd.f32 %v794, %v795
    %v797 = vtanh.pop %v796
    %v798 = vmul.f32 %v792, %v797
    %s799 = scalar_lea.vmem [#allocation5], 8
    %800 = vst [vmem:[%s799] sm:$0xff] %v798
    %s801 = scalar_lea.vmem [#allocation4], 64
    %v802 = vld [vmem:[%s801] sm:$0xff]
    %v803 = vld [vmem:[%s801 + $0x8] sm:$0xff]
    %v804 = vld [vmem:[%s801 + $0x10] sm:$0xff]
    %v805 = vld [vmem:[%s801 + $0x18] sm:$0xff]
    %806 = vmatprep.subr.mxu0 %v384
    %807 = vmatpush1.msra.mxu0 %v383
    %808 = vmatprep.subr.mxu0 %v388
    %809 = vmatpush1.msra.mxu0 %v387
    %810 = vmatprep.subr.mxu0 %v392
    %811 = vmatpush1.msra.mxu0 %v391
    %812 = vmatprep.subr.mxu0 %v396
    %813 = vmatpush1.msra.mxu0 %v395
    %814 = vmatprep.subr.mxu0 %v400
    %815 = vmatpush1.msra.mxu0 %v399
    %816 = vmatprep.subr.mxu0 %v404
    %817 = vmatpush1.msra.mxu0 %v403
    %818 = vmatprep.subr.mxu0 %v408
    %819 = vmatpush1.msra.mxu0 %v407
    %820 = vmatprep.subr.mxu0 %v412
    %821 = vmatpush1.msra.mxu0 %v411
    %822 = vmatprep.subr.mxu0 %v416
    %823 = vmatpush1.msra.mxu0 %v415
    %824 = vmatprep.subr.mxu0 %v420
    %825 = vmatpush1.msra.mxu0 %v419
    %826 = vmatprep.subr.mxu0 %v424
    %827 = vmatpush1.msra.mxu0 %v423
    %828 = vmatprep.subr.mxu0 %v428
    %829 = vmatpush1.msra.mxu0 %v427
    %830 = vmatprep.subr.mxu0 %v432
    %831 = vmatpush1.msra.mxu0 %v431
    %832 = vmatprep.subr.mxu0 %v436
    %833 = vmatpush1.msra.mxu0 %v435
    %834 = vmatprep.subr.mxu0 %v440
    %835 = vmatpush1.msra.mxu0 %v439
    %836 = vmatprep.subr.mxu0 %v444
    %837 = vmatpush1.msra.mxu0 %v443
    %838 = vmatprep.subr.mxu0 0.0
    %839 = vmatpush1.msra.mxu0 0.0
    %840 = vmatprep.subr.mxu0 0.0
    %841 = vmatpush1.msra.mxu0 0.0
    %842 = vmatprep.subr.mxu0 0.0
    %843 = vmatpush1.msra.mxu0 0.0
    %844 = vmatprep.subr.mxu0 0.0
    %845 = vmatpush1.msra.mxu0 0.0
    %846 = vmatprep.subr.mxu0 0.0
    %847 = vmatpush1.msra.mxu0 0.0
    %848 = vmatprep.subr.mxu0 0.0
    %849 = vmatpush1.msra.mxu0 0.0
    %850 = vmatprep.subr.mxu0 0.0
    %851 = vmatpush1.msra.mxu0 0.0
    %852 = vmatprep.subr.mxu0 0.0
    %853 = vmatpush1.msra.mxu0 0.0
    %854 = vmatprep.subr.mxu0 0.0
    %855 = vmatpush1.msra.mxu0 0.0
    %856 = vmatprep.subr.mxu0 0.0
    %857 = vmatpush1.msra.mxu0 0.0
    %858 = vmatprep.subr.mxu0 0.0
    %859 = vmatpush1.msra.mxu0 0.0
    %860 = vmatprep.subr.mxu0 0.0
    %861 = vmatpush1.msra.mxu0 0.0
    %862 = vmatprep.subr.mxu0 0.0
    %863 = vmatpush1.msra.mxu0 0.0
    %864 = vmatprep.subr.mxu0 0.0
    %865 = vmatpush1.msra.mxu0 0.0
    %866 = vmatprep.subr.mxu0 0.0
    %867 = vmatpush1.msra.mxu0 0.0
    %868 = vmatprep.subr.mxu0 0.0
    %869 = vmatpush1.msra.mxu0 0.0
    %870 = vmatprep.mubr.f32.mxu0 0.0
    %871 = vmatmul.mubr.f32.gmra.mrb[0].mxu0 %v798
    %v872 = vpop.f32.mrb[0].mxu0
    %v873 = vadd.f32 0.0, %v872
    %v874 = vpop.f32.mrb[0].mxu0
    %v875 = vadd.f32 0.0, %v874
    %876 = vdwg.mxu0
    %877 = vmatprep.subr.mxu0 %v386
    %878 = vmatpush1.msra.mxu0 %v385
    %879 = vmatprep.subr.mxu0 %v390
    %880 = vmatpush1.msra.mxu0 %v389
    %881 = vmatprep.subr.mxu0 %v394
    %882 = vmatpush1.msra.mxu0 %v393
    %883 = vmatprep.subr.mxu0 %v398
    %884 = vmatpush1.msra.mxu0 %v397
    %885 = vmatprep.subr.mxu0 %v402
    %886 = vmatpush1.msra.mxu0 %v401
    %887 = vmatprep.subr.mxu0 %v406
    %888 = vmatpush1.msra.mxu0 %v405
    %889 = vmatprep.subr.mxu0 %v410
    %890 = vmatpush1.msra.mxu0 %v409
    %891 = vmatprep.subr.mxu0 %v414
    %892 = vmatpush1.msra.mxu0 %v413
    %893 = vmatprep.subr.mxu0 %v418
    %894 = vmatpush1.msra.mxu0 %v417
    %895 = vmatprep.subr.mxu0 %v422
    %896 = vmatpush1.msra.mxu0 %v421
    %897 = vmatprep.subr.mxu0 %v426
    %898 = vmatpush1.msra.mxu0 %v425
    %899 = vmatprep.subr.mxu0 %v430
    %900 = vmatpush1.msra.mxu0 %v429
    %901 = vmatprep.subr.mxu0 %v434
    %902 = vmatpush1.msra.mxu0 %v433
    %903 = vmatprep.subr.mxu0 %v438
    %904 = vmatpush1.msra.mxu0 %v437
    %905 = vmatprep.subr.mxu0 %v442
    %906 = vmatpush1.msra.mxu0 %v441
    %907 = vmatprep.subr.mxu0 %v446
    %908 = vmatpush1.msra.mxu0 %v445
    %909 = vmatprep.subr.mxu0 0.0
    %910 = vmatpush1.msra.mxu0 0.0
    %911 = vmatprep.subr.mxu0 0.0
    %912 = vmatpush1.msra.mxu0 0.0
    %913 = vmatprep.subr.mxu0 0.0
    %914 = vmatpush1.msra.mxu0 0.0
    %915 = vmatprep.subr.mxu0 0.0
    %916 = vmatpush1.msra.mxu0 0.0
    %917 = vmatprep.subr.mxu0 0.0
    %918 = vmatpush1.msra.mxu0 0.0
    %919 = vmatprep.subr.mxu0 0.0
    %920 = vmatpush1.msra.mxu0 0.0
    %921 = vmatprep.subr.mxu0 0.0
    %922 = vmatpush1.msra.mxu0 0.0
    %923 = vmatprep.subr.mxu0 0.0
    %924 = vmatpush1.msra.mxu0 0.0
    %925 = vmatprep.subr.mxu0 0.0
    %926 = vmatpush1.msra.mxu0 0.0
    %927 = vmatprep.subr.mxu0 0.0
    %928 = vmatpush1.msra.mxu0 0.0
    %929 = vmatprep.subr.mxu0 0.0
    %930 = vmatpush1.msra.mxu0 0.0
    %931 = vmatprep.subr.mxu0 0.0
    %932 = vmatpush1.msra.mxu0 0.0
    %933 = vmatprep.subr.mxu0 0.0
    %934 = vmatpush1.msra.mxu0 0.0
    %935 = vmatprep.subr.mxu0 0.0
    %936 = vmatpush1.msra.mxu0 0.0
    %937 = vmatprep.subr.mxu0 0.0
    %938 = vmatpush1.msra.mxu0 0.0
    %939 = vmatprep.subr.mxu0 0.0
    %940 = vmatpush1.msra.mxu0 0.0
    %941 = vmatprep.mubr.f32.mxu0 0.0
    %942 = vmatmul.mubr.f32.gmra.mrb[0].mxu0 %v798
    %v943 = vpop.f32.mrb[0].mxu0
    %v944 = vadd.f32 0.0, %v943
    %v945 = vpop.f32.mrb[0].mxu0
    %v946 = vadd.f32 0.0, %v945
    %947 = vdwg.mxu0
    %v948 = vadd.f32 %v802, %v873
    %v949 = vadd.f32 %v803, %v875
    %v950 = vadd.f32 %v804, %v944
    %v951 = vadd.f32 %v805, %v946
    %v952 = vxor.u32 %v948, 2147483648
    %v953 = vxor.u32 %v949, 2147483648
    %v954 = vxor.u32 %v950, 2147483648
    %v955 = vmul.f32 %v952, 1.442695
    %v956 = vpow.pop %v955
    %v957 = vmul.f32 %v953, 1.442695
    %v958 = vpow.pop %v957
    %v959 = vmul.f32 %v954, 1.442695
    %v960 = vpow.pop %v959
    %v961 = vadd.f32 %v956, 1.0
    %v962 = vadd.f32 %v958, 1.0
    %v963 = vadd.f32 %v960, 1.0
    %v964 = vrcp.pop %v961
    %v965 = vmul.f32 1.0, %v964
    %v966 = vrcp.pop %v962
    %v967 = vmul.f32 1.0, %v966
    %v968 = vrcp.pop %v963
    %v969 = vmul.f32 1.0, %v968
    %v970 = vtanh.pop %v951
    %v971 = vmul.f32 %v967, %v796
    %v972 = vmul.f32 %v965, %v970
    %v973 = vadd.f32 %v971, %v972
    %v974 = vtanh.pop %v973
    %v975 = vmul.f32 %v969, %v974
    %s976 = scalar_lea.vmem [#allocation5], 16
    %977 = vst [vmem:[%s976] sm:$0xff] %v975
    %s978 = scalar_lea.vmem [#allocation4], 96
    %v979 = vld [vmem:[%s978] sm:$0xff]
    %v980 = vld [vmem:[%s978 + $0x8] sm:$0xff]
    %v981 = vld [vmem:[%s978 + $0x10] sm:$0xff]
    %v982 = vld [vmem:[%s978 + $0x18] sm:$0xff]
    %983 = vmatprep.subr.mxu0 %v384
    %984 = vmatpush1.msra.mxu0 %v383
    %985 = vmatprep.subr.mxu0 %v388
    %986 = vmatpush1.msra.mxu0 %v387
    %987 = vmatprep.subr.mxu0 %v392
    %988 = vmatpush1.msra.mxu0 %v391
    %989 = vmatprep.subr.mxu0 %v396
    %990 = vmatpush1.msra.mxu0 %v395
    %991 = vmatprep.subr.mxu0 %v400
    %992 = vmatpush1.msra.mxu0 %v399
    %993 = vmatprep.subr.mxu0 %v404
    %994 = vmatpush1.msra.mxu0 %v403
    %995 = vmatprep.subr.mxu0 %v408
    %996 = vmatpush1.msra.mxu0 %v407
    %997 = vmatprep.subr.mxu0 %v412
    %998 = vmatpush1.msra.mxu0 %v411
    %999 = vmatprep.subr.mxu0 %v416
    %1000 = vmatpush1.msra.mxu0 %v415
    %1001 = vmatprep.subr.mxu0 %v420
    %1002 = vmatpush1.msra.mxu0 %v419
    %1003 = vmatprep.subr.mxu0 %v424
    %1004 = vmatpush1.msra.mxu0 %v423
    %1005 = vmatprep.subr.mxu0 %v428
    %1006 = vmatpush1.msra.mxu0 %v427
    %1007 = vmatprep.subr.mxu0 %v432
    %1008 = vmatpush1.msra.mxu0 %v431
    %1009 = vmatprep.subr.mxu0 %v436
    %1010 = vmatpush1.msra.mxu0 %v435
    %1011 = vmatprep.subr.mxu0 %v440
    %1012 = vmatpush1.msra.mxu0 %v439
    %1013 = vmatprep.subr.mxu0 %v444
    %1014 = vmatpush1.msra.mxu0 %v443
    %1015 = vmatprep.subr.mxu0 0.0
    %1016 = vmatpush1.msra.mxu0 0.0
    %1017 = vmatprep.subr.mxu0 0.0
    %1018 = vmatpush1.msra.mxu0 0.0
    %1019 = vmatprep.subr.mxu0 0.0
    %1020 = vmatpush1.msra.mxu0 0.0
    %1021 = vmatprep.subr.mxu0 0.0
    %1022 = vmatpush1.msra.mxu0 0.0
    %1023 = vmatprep.subr.mxu0 0.0
    %1024 = vmatpush1.msra.mxu0 0.0
    %1025 = vmatprep.subr.mxu0 0.0
    %1026 = vmatpush1.msra.mxu0 0.0
    %1027 = vmatprep.subr.mxu0 0.0
    %1028 = vmatpush1.msra.mxu0 0.0
    %1029 = vmatprep.subr.mxu0 0.0
    %1030 = vmatpush1.msra.mxu0 0.0
    %1031 = vmatprep.subr.mxu0 0.0
    %1032 = vmatpush1.msra.mxu0 0.0
    %1033 = vmatprep.subr.mxu0 0.0
    %1034 = vmatpush1.msra.mxu0 0.0
    %1035 = vmatprep.subr.mxu0 0.0
    %1036 = vmatpush1.msra.mxu0 0.0
    %1037 = vmatprep.subr.mxu0 0.0
    %1038 = vmatpush1.msra.mxu0 0.0
    %1039 = vmatprep.subr.mxu0 0.0
    %1040 = vmatpush1.msra.mxu0 0.0
    %1041 = vmatprep.subr.mxu0 0.0
    %1042 = vmatpush1.msra.mxu0 0.0
    %1043 = vmatprep.subr.mxu0 0.0
    %1044 = vmatpush1.msra.mxu0 0.0
    %1045 = vmatprep.subr.mxu0 0.0
    %1046 = vmatpush1.msra.mxu0 0.0
    %1047 = vmatprep.mubr.f32.mxu0 0.0
    %1048 = vmatmul.mubr.f32.gmra.mrb[0].mxu0 %v975
    %v1049 = vpop.f32.mrb[0].mxu0
    %v1050 = vadd.f32 0.0, %v1049
    %v1051 = vpop.f32.mrb[0].mxu0
    %v1052 = vadd.f32 0.0, %v1051
    %1053 = vdwg.mxu0
    %1054 = vmatprep.subr.mxu0 %v386
    %1055 = vmatpush1.msra.mxu0 %v385
    %1056 = vmatprep.subr.mxu0 %v390
    %1057 = vmatpush1.msra.mxu0 %v389
    %1058 = vmatprep.subr.mxu0 %v394
    %1059 = vmatpush1.msra.mxu0 %v393
    %1060 = vmatprep.subr.mxu0 %v398
    %1061 = vmatpush1.msra.mxu0 %v397
    %1062 = vmatprep.subr.mxu0 %v402
    %1063 = vmatpush1.msra.mxu0 %v401
    %1064 = vmatprep.subr.mxu0 %v406
    %1065 = vmatpush1.msra.mxu0 %v405
    %1066 = vmatprep.subr.mxu0 %v410
    %1067 = vmatpush1.msra.mxu0 %v409
    %1068 = vmatprep.subr.mxu0 %v414
    %1069 = vmatpush1.msra.mxu0 %v413
    %1070 = vmatprep.subr.mxu0 %v418
    %1071 = vmatpush1.msra.mxu0 %v417
    %1072 = vmatprep.subr.mxu0 %v422
    %1073 = vmatpush1.msra.mxu0 %v421
    %1074 = vmatprep.subr.mxu0 %v426
    %1075 = vmatpush1.msra.mxu0 %v425
    %1076 = vmatprep.subr.mxu0 %v430
    %1077 = vmatpush1.msra.mxu0 %v429
    %1078 = vmatprep.subr.mxu0 %v434
    %1079 = vmatpush1.msra.mxu0 %v433
    %1080 = vmatprep.subr.mxu0 %v438
    %1081 = vmatpush1.msra.mxu0 %v437
    %1082 = vmatprep.subr.mxu0 %v442
    %1083 = vmatpush1.msra.mxu0 %v441
    %1084 = vmatprep.subr.mxu0 %v446
    %1085 = vmatpush1.msra.mxu0 %v445
    %1086 = vmatprep.subr.mxu0 0.0
    %1087 = vmatpush1.msra.mxu0 0.0
    %1088 = vmatprep.subr.mxu0 0.0
    %1089 = vmatpush1.msra.mxu0 0.0
    %1090 = vmatprep.subr.mxu0 0.0
    %1091 = vmatpush1.msra.mxu0 0.0
    %1092 = vmatprep.subr.mxu0 0.0
    %1093 = vmatpush1.msra.mxu0 0.0
    %1094 = vmatprep.subr.mxu0 0.0
    %1095 = vmatpush1.msra.mxu0 0.0
    %1096 = vmatprep.subr.mxu0 0.0
    %1097 = vmatpush1.msra.mxu0 0.0
    %1098 = vmatprep.subr.mxu0 0.0
    %1099 = vmatpush1.msra.mxu0 0.0
    %1100 = vmatprep.subr.mxu0 0.0
    %1101 = vmatpush1.msra.mxu0 0.0
    %1102 = vmatprep.subr.mxu0 0.0
    %1103 = vmatpush1.msra.mxu0 0.0
    %1104 = vmatprep.subr.mxu0 0.0
    %1105 = vmatpush1.msra.mxu0 0.0
    %1106 = vmatprep.subr.mxu0 0.0
    %1107 = vmatpush1.msra.mxu0 0.0
    %1108 = vmatprep.subr.mxu0 0.0
    %1109 = vmatpush1.msra.mxu0 0.0
    %1110 = vmatprep.subr.mxu0 0.0
    %1111 = vmatpush1.msra.mxu0 0.0
    %1112 = vmatprep.subr.mxu0 0.0
    %1113 = vmatpush1.msra.mxu0 0.0
    %1114 = vmatprep.subr.mxu0 0.0
    %1115 = vmatpush1.msra.mxu0 0.0
    %1116 = vmatprep.subr.mxu0 0.0
    %1117 = vmatpush1.msra.mxu0 0.0
    %1118 = vmatprep.mubr.f32.mxu0 0.0
    %1119 = vmatmul.mubr.f32.gmra.mrb[0].mxu0 %v975
    %v1120 = vpop.f32.mrb[0].mxu0
    %v1121 = vadd.f32 0.0, %v1120
    %v1122 = vpop.f32.mrb[0].mxu0
    %v1123 = vadd.f32 0.0, %v1122
    %1124 = vdwg.mxu0
    %v1125 = vadd.f32 %v979, %v1050
    %v1126 = vadd.f32 %v980, %v1052
    %v1127 = vadd.f32 %v981, %v1121
    %v1128 = vadd.f32 %v982, %v1123
    %v1129 = vxor.u32 %v1125, 2147483648
    %v1130 = vxor.u32 %v1126, 2147483648
    %v1131 = vxor.u32 %v1127, 2147483648
    %v1132 = vmul.f32 %v1129, 1.442695
    %v1133 = vpow.pop %v1132
    %v1134 = vmul.f32 %v1130, 1.442695
    %v1135 = vpow.pop %v1134
    %v1136 = vmul.f32 %v1131, 1.442695
    %v1137 = vpow.pop %v1136
    %v1138 = vadd.f32 %v1133, 1.0
    %v1139 = vadd.f32 %v1135, 1.0
    %v1140 = vadd.f32 %v1137, 1.0
    %v1141 = vrcp.pop %v1138
    %v1142 = vmul.f32 1.0, %v1141
    %v1143 = vrcp.pop %v1139
    %v1144 = vmul.f32 1.0, %v1143
    %v1145 = vrcp.pop %v1140
    %v1146 = vmul.f32 1.0, %v1145
    %v1147 = vtanh.pop %v1128
    %v1148 = vmul.f32 %v1144, %v973
    %v1149 = vmul.f32 %v1142, %v1147
    %v1150 = vadd.f32 %v1148, %v1149
    %v1151 = vtanh.pop %v1150
    %v1152 = vmul.f32 %v1146, %v1151
    %s1153 = scalar_lea.vmem [#allocation5], 24
    %1154 = vst [vmem:[%s1153] sm:$0xff] %v1152
    %s1155 = scalar_lea.vmem [#allocation4], 128
    %v1156 = vld [vmem:[%s1155] sm:$0xff]
    %v1157 = vld [vmem:[%s1155 + $0x8] sm:$0xff]
    %v1158 = vld [vmem:[%s1155 + $0x10] sm:$0xff]
    %v1159 = vld [vmem:[%s1155 + $0x18] sm:$0xff]
    %1160 = vmatprep.subr.mxu0 %v384
    %1161 = vmatpush1.msra.mxu0 %v383
    %1162 = vmatprep.subr.mxu0 %v388
    %1163 = vmatpush1.msra.mxu0 %v387
    %1164 = vmatprep.subr.mxu0 %v392
    %1165 = vmatpush1.msra.mxu0 %v391
    %1166 = vmatprep.subr.mxu0 %v396
    %1167 = vmatpush1.msra.mxu0 %v395
    %1168 = vmatprep.subr.mxu0 %v400
    %1169 = vmatpush1.msra.mxu0 %v399
    %1170 = vmatprep.subr.mxu0 %v404
    %1171 = vmatpush1.msra.mxu0 %v403
    %1172 = vmatprep.subr.mxu0 %v408
    %1173 = vmatpush1.msra.mxu0 %v407
    %1174 = vmatprep.subr.mxu0 %v412
    %1175 = vmatpush1.msra.mxu0 %v411
    %1176 = vmatprep.subr.mxu0 %v416
    %1177 = vmatpush1.msra.mxu0 %v415
    %1178 = vmatprep.subr.mxu0 %v420
    %1179 = vmatpush1.msra.mxu0 %v419
    %1180 = vmatprep.subr.mxu0 %v424
    %1181 = vmatpush1.msra.mxu0 %v423
    %1182 = vmatprep.subr.mxu0 %v428
    %1183 = vmatpush1.msra.mxu0 %v427
    %1184 = vmatprep.subr.mxu0 %v432
    %1185 = vmatpush1.msra.mxu0 %v431
    %1186 = vmatprep.subr.mxu0 %v436
    %1187 = vmatpush1.msra.mxu0 %v435
    %1188 = vmatprep.subr.mxu0 %v440
    %1189 = vmatpush1.msra.mxu0 %v439
    %1190 = vmatprep.subr.mxu0 %v444
    %1191 = vmatpush1.msra.mxu0 %v443
    %1192 = vmatprep.subr.mxu0 0.0
    %1193 = vmatpush1.msra.mxu0 0.0
    %1194 = vmatprep.subr.mxu0 0.0
    %1195 = vmatpush1.msra.mxu0 0.0
    %1196 = vmatprep.subr.mxu0 0.0
    %1197 = vmatpush1.msra.mxu0 0.0
    %1198 = vmatprep.subr.mxu0 0.0
    %1199 = vmatpush1.msra.mxu0 0.0
    %1200 = vmatprep.subr.mxu0 0.0
    %1201 = vmatpush1.msra.mxu0 0.0
    %1202 = vmatprep.subr.mxu0 0.0
    %1203 = vmatpush1.msra.mxu0 0.0
    %1204 = vmatprep.subr.mxu0 0.0
    %1205 = vmatpush1.msra.mxu0 0.0
    %1206 = vmatprep.subr.mxu0 0.0
    %1207 = vmatpush1.msra.mxu0 0.0
    %1208 = vmatprep.subr.mxu0 0.0
    %1209 = vmatpush1.msra.mxu0 0.0
    %1210 = vmatprep.subr.mxu0 0.0
    %1211 = vmatpush1.msra.mxu0 0.0
    %1212 = vmatprep.subr.mxu0 0.0
    %1213 = vmatpush1.msra.mxu0 0.0
    %1214 = vmatprep.subr.mxu0 0.0
    %1215 = vmatpush1.msra.mxu0 0.0
    %1216 = vmatprep.subr.mxu0 0.0
    %1217 = vmatpush1.msra.mxu0 0.0
    %1218 = vmatprep.subr.mxu0 0.0
    %1219 = vmatpush1.msra.mxu0 0.0
    %1220 = vmatprep.subr.mxu0 0.0
    %1221 = vmatpush1.msra.mxu0 0.0
    %1222 = vmatprep.subr.mxu0 0.0
    %1223 = vmatpush1.msra.mxu0 0.0
    %1224 = vmatprep.mubr.f32.mxu0 0.0
    %1225 = vmatmul.mubr.f32.gmra.mrb[0].mxu0 %v1152
    %v1226 = vpop.f32.mrb[0].mxu0
    %v1227 = vadd.f32 0.0, %v1226
    %v1228 = vpop.f32.mrb[0].mxu0
    %v1229 = vadd.f32 0.0, %v1228
    %1230 = vdwg.mxu0
    %1231 = vmatprep.subr.mxu0 %v386
    %1232 = vmatpush1.msra.mxu0 %v385
    %1233 = vmatprep.subr.mxu0 %v390
    %1234 = vmatpush1.msra.mxu0 %v389
    %1235 = vmatprep.subr.mxu0 %v394
    %1236 = vmatpush1.msra.mxu0 %v393
    %1237 = vmatprep.subr.mxu0 %v398
    %1238 = vmatpush1.msra.mxu0 %v397
    %1239 = vmatprep.subr.mxu0 %v402
    %1240 = vmatpush1.msra.mxu0 %v401
    %1241 = vmatprep.subr.mxu0 %v406
    %1242 = vmatpush1.msra.mxu0 %v405
    %1243 = vmatprep.subr.mxu0 %v410
    %1244 = vmatpush1.msra.mxu0 %v409
    %1245 = vmatprep.subr.mxu0 %v414
    %1246 = vmatpush1.msra.mxu0 %v413
    %1247 = vmatprep.subr.mxu0 %v418
    %1248 = vmatpush1.msra.mxu0 %v417
    %1249 = vmatprep.subr.mxu0 %v422
    %1250 = vmatpush1.msra.mxu0 %v421
    %1251 = vmatprep.subr.mxu0 %v426
    %1252 = vmatpush1.msra.mxu0 %v425
    %1253 = vmatprep.subr.mxu0 %v430
    %1254 = vmatpush1.msra.mxu0 %v429
    %1255 = vmatprep.subr.mxu0 %v434
    %1256 = vmatpush1.msra.mxu0 %v433
    %1257 = vmatprep.subr.mxu0 %v438
    %1258 = vmatpush1.msra.mxu0 %v437
    %1259 = vmatprep.subr.mxu0 %v442
    %1260 = vmatpush1.msra.mxu0 %v441
    %1261 = vmatprep.subr.mxu0 %v446
    %1262 = vmatpush1.msra.mxu0 %v445
    %1263 = vmatprep.subr.mxu0 0.0
    %1264 = vmatpush1.msra.mxu0 0.0
    %1265 = vmatprep.subr.mxu0 0.0
    %1266 = vmatpush1.msra.mxu0 0.0
    %1267 = vmatprep.subr.mxu0 0.0
    %1268 = vmatpush1.msra.mxu0 0.0
    %1269 = vmatprep.subr.mxu0 0.0
    %1270 = vmatpush1.msra.mxu0 0.0
    %1271 = vmatprep.subr.mxu0 0.0
    %1272 = vmatpush1.msra.mxu0 0.0
    %1273 = vmatprep.subr.mxu0 0.0
    %1274 = vmatpush1.msra.mxu0 0.0
    %1275 = vmatprep.subr.mxu0 0.0
    %1276 = vmatpush1.msra.mxu0 0.0
    %1277 = vmatprep.subr.mxu0 0.0
    %1278 = vmatpush1.msra.mxu0 0.0
    %1279 = vmatprep.subr.mxu0 0.0
    %1280 = vmatpush1.msra.mxu0 0.0
    %1281 = vmatprep.subr.mxu0 0.0
    %1282 = vmatpush1.msra.mxu0 0.0
    %1283 = vmatprep.subr.mxu0 0.0
    %1284 = vmatpush1.msra.mxu0 0.0
    %1285 = vmatprep.subr.mxu0 0.0
    %1286 = vmatpush1.msra.mxu0 0.0
    %1287 = vmatprep.subr.mxu0 0.0
    %1288 = vmatpush1.msra.mxu0 0.0
    %1289 = vmatprep.subr.mxu0 0.0
    %1290 = vmatpush1.msra.mxu0 0.0
    %1291 = vmatprep.subr.mxu0 0.0
    %1292 = vmatpush1.msra.mxu0 0.0
    %1293 = vmatprep.subr.mxu0 0.0
    %1294 = vmatpush1.msra.mxu0 0.0
    %1295 = vmatprep.mubr.f32.mxu0 0.0
    %1296 = vmatmul.mubr.f32.gmra.mrb[0].mxu0 %v1152
    %v1297 = vpop.f32.mrb[0].mxu0
    %v1298 = vadd.f32 0.0, %v1297
    %v1299 = vpop.f32.mrb[0].mxu0
    %v1300 = vadd.f32 0.0, %v1299
    %1301 = vdwg.mxu0
    %v1302 = vadd.f32 %v1156, %v1227
    %v1303 = vadd.f32 %v1157, %v1229
    %v1304 = vadd.f32 %v1158, %v1298
    %v1305 = vadd.f32 %v1159, %v1300
    %v1306 = vxor.u32 %v1302, 2147483648
    %v1307 = vxor.u32 %v1303, 2147483648
    %v1308 = vxor.u32 %v1304, 2147483648
    %v1309 = vmul.f32 %v1306, 1.442695
    %v1310 = vpow.pop %v1309
    %v1311 = vmul.f32 %v1307, 1.442695
    %v1312 = vpow.pop %v1311
    %v1313 = vmul.f32 %v1308, 1.442695
    %v1314 = vpow.pop %v1313
    %v1315 = vadd.f32 %v1310, 1.0
    %v1316 = vadd.f32 %v1312, 1.0
    %v1317 = vadd.f32 %v1314, 1.0
    %v1318 = vrcp.pop %v1315
    %v1319 = vmul.f32 1.0, %v1318
    %v1320 = vrcp.pop %v1316
    %v1321 = vmul.f32 1.0, %v1320
    %v1322 = vrcp.pop %v1317
    %v1323 = vmul.f32 1.0, %v1322
    %v1324 = vtanh.pop %v1305
    %v1325 = vmul.f32 %v1321, %v1150
    %v1326 = vmul.f32 %v1319, %v1324
    %v1327 = vadd.f32 %v1325, %v1326
    %v1328 = vtanh.pop %v1327
    %v1329 = vmul.f32 %v1323, %v1328
    %s1330 = scalar_lea.vmem [#allocation5], 32
    %1331 = vst [vmem:[%s1330] sm:$0xff] %v1329
    %s1332 = scalar_lea.vmem [#allocation4], 160
    %v1333 = vld [vmem:[%s1332] sm:$0xff]
    %v1334 = vld [vmem:[%s1332 + $0x8] sm:$0xff]
    %v1335 = vld [vmem:[%s1332 + $0x10] sm:$0xff]
    %v1336 = vld [vmem:[%s1332 + $0x18] sm:$0xff]
    %1337 = vmatprep.subr.mxu0 %v384
    %1338 = vmatpush1.msra.mxu0 %v383
    %1339 = vmatprep.subr.mxu0 %v388
    %1340 = vmatpush1.msra.mxu0 %v387
    %1341 = vmatprep.subr.mxu0 %v392
    %1342 = vmatpush1.msra.mxu0 %v391
    %1343 = vmatprep.subr.mxu0 %v396
    %1344 = vmatpush1.msra.mxu0 %v395
    %1345 = vmatprep.subr.mxu0 %v400
    %1346 = vmatpush1.msra.mxu0 %v399
    %1347 = vmatprep.subr.mxu0 %v404
    %1348 = vmatpush1.msra.mxu0 %v403
    %1349 = vmatprep.subr.mxu0 %v408
    %1350 = vmatpush1.msra.mxu0 %v407
    %1351 = vmatprep.subr.mxu0 %v412
    %1352 = vmatpush1.msra.mxu0 %v411
    %1353 = vmatprep.subr.mxu0 %v416
    %1354 = vmatpush1.msra.mxu0 %v415
    %1355 = vmatprep.subr.mxu0 %v420
    %1356 = vmatpush1.msra.mxu0 %v419
    %1357 = vmatprep.subr.mxu0 %v424
    %1358 = vmatpush1.msra.mxu0 %v423
    %1359 = vmatprep.subr.mxu0 %v428
    %1360 = vmatpush1.msra.mxu0 %v427
    %1361 = vmatprep.subr.mxu0 %v432
    %1362 = vmatpush1.msra.mxu0 %v431
    %1363 = vmatprep.subr.mxu0 %v436
    %1364 = vmatpush1.msra.mxu0 %v435
    %1365 = vmatprep.subr.mxu0 %v440
    %1366 = vmatpush1.msra.mxu0 %v439
    %1367 = vmatprep.subr.mxu0 %v444
    %1368 = vmatpush1.msra.mxu0 %v443
    %1369 = vmatprep.subr.mxu0 0.0
    %1370 = vmatpush1.msra.mxu0 0.0
    %1371 = vmatprep.subr.mxu0 0.0
    %1372 = vmatpush1.msra.mxu0 0.0
    %1373 = vmatprep.subr.mxu0 0.0
    %1374 = vmatpush1.msra.mxu0 0.0
    %1375 = vmatprep.subr.mxu0 0.0
    %1376 = vmatpush1.msra.mxu0 0.0
    %1377 = vmatprep.subr.mxu0 0.0
    %1378 = vmatpush1.msra.mxu0 0.0
    %1379 = vmatprep.subr.mxu0 0.0
    %1380 = vmatpush1.msra.mxu0 0.0
    %1381 = vmatprep.subr.mxu0 0.0
    %1382 = vmatpush1.msra.mxu0 0.0
    %1383 = vmatprep.subr.mxu0 0.0
    %1384 = vmatpush1.msra.mxu0 0.0
    %1385 = vmatprep.subr.mxu0 0.0
    %1386 = vmatpush1.msra.mxu0 0.0
    %1387 = vmatprep.subr.mxu0 0.0
    %1388 = vmatpush1.msra.mxu0 0.0
    %1389 = vmatprep.subr.mxu0 0.0
    %1390 = vmatpush1.msra.mxu0 0.0
    %1391 = vmatprep.subr.mxu0 0.0
    %1392 = vmatpush1.msra.mxu0 0.0
    %1393 = vmatprep.subr.mxu0 0.0
    %1394 = vmatpush1.msra.mxu0 0.0
    %1395 = vmatprep.subr.mxu0 0.0
    %1396 = vmatpush1.msra.mxu0 0.0
    %1397 = vmatprep.subr.mxu0 0.0
    %1398 = vmatpush1.msra.mxu0 0.0
    %1399 = vmatprep.subr.mxu0 0.0
    %1400 = vmatpush1.msra.mxu0 0.0
    %1401 = vmatprep.mubr.f32.mxu0 0.0
    %1402 = vmatmul.mubr.f32.gmra.mrb[0].mxu0 %v1329
    %v1403 = vpop.f32.mrb[0].mxu0
    %v1404 = vadd.f32 0.0, %v1403
    %v1405 = vpop.f32.mrb[0].mxu0
    %v1406 = vadd.f32 0.0, %v1405
    %1407 = vdwg.mxu0
    %1408 = vmatprep.subr.mxu0 %v386
    %1409 = vmatpush1.msra.mxu0 %v385
    %1410 = vmatprep.subr.mxu0 %v390
    %1411 = vmatpush1.msra.mxu0 %v389
    %1412 = vmatprep.subr.mxu0 %v394
    %1413 = vmatpush1.msra.mxu0 %v393
    %1414 = vmatprep.subr.mxu0 %v398
    %1415 = vmatpush1.msra.mxu0 %v397
    %1416 = vmatprep.subr.mxu0 %v402
    %1417 = vmatpush1.msra.mxu0 %v401
    %1418 = vmatprep.subr.mxu0 %v406
    %1419 = vmatpush1.msra.mxu0 %v405
    %1420 = vmatprep.subr.mxu0 %v410
    %1421 = vmatpush1.msra.mxu0 %v409
    %1422 = vmatprep.subr.mxu0 %v414
    %1423 = vmatpush1.msra.mxu0 %v413
    %1424 = vmatprep.subr.mxu0 %v418
    %1425 = vmatpush1.msra.mxu0 %v417
    %1426 = vmatprep.subr.mxu0 %v422
    %1427 = vmatpush1.msra.mxu0 %v421
    %1428 = vmatprep.subr.mxu0 %v426
    %1429 = vmatpush1.msra.mxu0 %v425
    %1430 = vmatprep.subr.mxu0 %v430
    %1431 = vmatpush1.msra.mxu0 %v429
    %1432 = vmatprep.subr.mxu0 %v434
    %1433 = vmatpush1.msra.mxu0 %v433
    %1434 = vmatprep.subr.mxu0 %v438
    %1435 = vmatpush1.msra.mxu0 %v437
    %1436 = vmatprep.subr.mxu0 %v442
    %1437 = vmatpush1.msra.mxu0 %v441
    %1438 = vmatprep.subr.mxu0 %v446
    %1439 = vmatpush1.msra.mxu0 %v445
    %1440 = vmatprep.subr.mxu0 0.0
    %1441 = vmatpush1.msra.mxu0 0.0
    %1442 = vmatprep.subr.mxu0 0.0
    %1443 = vmatpush1.msra.mxu0 0.0
    %1444 = vmatprep.subr.mxu0 0.0
    %1445 = vmatpush1.msra.mxu0 0.0
    %1446 = vmatprep.subr.mxu0 0.0
    %1447 = vmatpush1.msra.mxu0 0.0
    %1448 = vmatprep.subr.mxu0 0.0
    %1449 = vmatpush1.msra.mxu0 0.0
    %1450 = vmatprep.subr.mxu0 0.0
    %1451 = vmatpush1.msra.mxu0 0.0
    %1452 = vmatprep.subr.mxu0 0.0
    %1453 = vmatpush1.msra.mxu0 0.0
    %1454 = vmatprep.subr.mxu0 0.0
    %1455 = vmatpush1.msra.mxu0 0.0
    %1456 = vmatprep.subr.mxu0 0.0
    %1457 = vmatpush1.msra.mxu0 0.0
    %1458 = vmatprep.subr.mxu0 0.0
    %1459 = vmatpush1.msra.mxu0 0.0
    %1460 = vmatprep.subr.mxu0 0.0
    %1461 = vmatpush1.msra.mxu0 0.0
    %1462 = vmatprep.subr.mxu0 0.0
    %1463 = vmatpush1.msra.mxu0 0.0
    %1464 = vmatprep.subr.mxu0 0.0
    %1465 = vmatpush1.msra.mxu0 0.0
    %1466 = vmatprep.subr.mxu0 0.0
    %1467 = vmatpush1.msra.mxu0 0.0
    %1468 = vmatprep.subr.mxu0 0.0
    %1469 = vmatpush1.msra.mxu0 0.0
    %1470 = vmatprep.subr.mxu0 0.0
    %1471 = vmatpush1.msra.mxu0 0.0
    %1472 = vmatprep.mubr.f32.mxu0 0.0
    %1473 = vmatmul.mubr.f32.gmra.mrb[0].mxu0 %v1329
    %v1474 = vpop.f32.mrb[0].mxu0
    %v1475 = vadd.f32 0.0, %v1474
    %v1476 = vpop.f32.mrb[0].mxu0
    %v1477 = vadd.f32 0.0, %v1476
    %1478 = vdwg.mxu0
    %v1479 = vadd.f32 %v1333, %v1404
    %v1480 = vadd.f32 %v1334, %v1406
    %v1481 = vadd.f32 %v1335, %v1475
    %v1482 = vadd.f32 %v1336, %v1477
    %v1483 = vxor.u32 %v1479, 2147483648
    %v1484 = vxor.u32 %v1480, 2147483648
    %v1485 = vxor.u32 %v1481, 2147483648
    %v1486 = vmul.f32 %v1483, 1.442695
    %v1487 = vpow.pop %v1486
    %v1488 = vmul.f32 %v1484, 1.442695
    %v1489 = vpow.pop %v1488
    %v1490 = vmul.f32 %v1485, 1.442695
    %v1491 = vpow.pop %v1490
    %v1492 = vadd.f32 %v1487, 1.0
    %v1493 = vadd.f32 %v1489, 1.0
    %v1494 = vadd.f32 %v1491, 1.0
    %v1495 = vrcp.pop %v1492
    %v1496 = vmul.f32 1.0, %v1495
    %v1497 = vrcp.pop %v1493
    %v1498 = vmul.f32 1.0, %v1497
    %v1499 = vrcp.pop %v1494
    %v1500 = vmul.f32 1.0, %v1499
    %v1501 = vtanh.pop %v1482
    %v1502 = vmul.f32 %v1498, %v1327
    %v1503 = vmul.f32 %v1496, %v1501
    %v1504 = vadd.f32 %v1502, %v1503
    %v1505 = vtanh.pop %v1504
    %v1506 = vmul.f32 %v1500, %v1505
    %s1507 = scalar_lea.vmem [#allocation5], 40
    %1508 = vst [vmem:[%s1507] sm:$0xff] %v1506
    %s1509 = scalar_lea.vmem [#allocation4], 192
    %v1510 = vld [vmem:[%s1509] sm:$0xff]
    %v1511 = vld [vmem:[%s1509 + $0x8] sm:$0xff]
    %v1512 = vld [vmem:[%s1509 + $0x10] sm:$0xff]
    %v1513 = vld [vmem:[%s1509 + $0x18] sm:$0xff]
    %1514 = vmatprep.subr.mxu0 %v384
    %1515 = vmatpush1.msra.mxu0 %v383
    %1516 = vmatprep.subr.mxu0 %v388
    %1517 = vmatpush1.msra.mxu0 %v387
    %1518 = vmatprep.subr.mxu0 %v392
    %1519 = vmatpush1.msra.mxu0 %v391
    %1520 = vmatprep.subr.mxu0 %v396
    %1521 = vmatpush1.msra.mxu0 %v395
    %1522 = vmatprep.subr.mxu0 %v400
    %1523 = vmatpush1.msra.mxu0 %v399
    %1524 = vmatprep.subr.mxu0 %v404
    %1525 = vmatpush1.msra.mxu0 %v403
    %1526 = vmatprep.subr.mxu0 %v408
    %1527 = vmatpush1.msra.mxu0 %v407
    %1528 = vmatprep.subr.mxu0 %v412
    %1529 = vmatpush1.msra.mxu0 %v411
    %1530 = vmatprep.subr.mxu0 %v416
    %1531 = vmatpush1.msra.mxu0 %v415
    %1532 = vmatprep.subr.mxu0 %v420
    %1533 = vmatpush1.msra.mxu0 %v419
    %1534 = vmatprep.subr.mxu0 %v424
    %1535 = vmatpush1.msra.mxu0 %v423
    %1536 = vmatprep.subr.mxu0 %v428
    %1537 = vmatpush1.msra.mxu0 %v427
    %1538 = vmatprep.subr.mxu0 %v432
    %1539 = vmatpush1.msra.mxu0 %v431
    %1540 = vmatprep.subr.mxu0 %v436
    %1541 = vmatpush1.msra.mxu0 %v435
    %1542 = vmatprep.subr.mxu0 %v440
    %1543 = vmatpush1.msra.mxu0 %v439
    %1544 = vmatprep.subr.mxu0 %v444
    %1545 = vmatpush1.msra.mxu0 %v443
    %1546 = vmatprep.subr.mxu0 0.0
    %1547 = vmatpush1.msra.mxu0 0.0
    %1548 = vmatprep.subr.mxu0 0.0
    %1549 = vmatpush1.msra.mxu0 0.0
    %1550 = vmatprep.subr.mxu0 0.0
    %1551 = vmatpush1.msra.mxu0 0.0
    %1552 = vmatprep.subr.mxu0 0.0
    %1553 = vmatpush1.msra.mxu0 0.0
    %1554 = vmatprep.subr.mxu0 0.0
    %1555 = vmatpush1.msra.mxu0 0.0
    %1556 = vmatprep.subr.mxu0 0.0
    %1557 = vmatpush1.msra.mxu0 0.0
    %1558 = vmatprep.subr.mxu0 0.0
    %1559 = vmatpush1.msra.mxu0 0.0
    %1560 = vmatprep.subr.mxu0 0.0
    %1561 = vmatpush1.msra.mxu0 0.0
    %1562 = vmatprep.subr.mxu0 0.0
    %1563 = vmatpush1.msra.mxu0 0.0
    %1564 = vmatprep.subr.mxu0 0.0
    %1565 = vmatpush1.msra.mxu0 0.0
    %1566 = vmatprep.subr.mxu0 0.0
    %1567 = vmatpush1.msra.mxu0 0.0
    %1568 = vmatprep.subr.mxu0 0.0
    %1569 = vmatpush1.msra.mxu0 0.0
    %1570 = vmatprep.subr.mxu0 0.0
    %1571 = vmatpush1.msra.mxu0 0.0
    %1572 = vmatprep.subr.mxu0 0.0
    %1573 = vmatpush1.msra.mxu0 0.0
    %1574 = vmatprep.subr.mxu0 0.0
    %1575 = vmatpush1.msra.mxu0 0.0
    %1576 = vmatprep.subr.mxu0 0.0
    %1577 = vmatpush1.msra.mxu0 0.0
    %1578 = vmatprep.mubr.f32.mxu0 0.0
    %1579 = vmatmul.mubr.f32.gmra.mrb[0].mxu0 %v1506
    %v1580 = vpop.f32.mrb[0].mxu0
    %v1581 = vadd.f32 0.0, %v1580
    %v1582 = vpop.f32.mrb[0].mxu0
    %v1583 = vadd.f32 0.0, %v1582
    %1584 = vdwg.mxu0
    %1585 = vmatprep.subr.mxu0 %v386
    %1586 = vmatpush1.msra.mxu0 %v385
    %1587 = vmatprep.subr.mxu0 %v390
    %1588 = vmatpush1.msra.mxu0 %v389
    %1589 = vmatprep.subr.mxu0 %v394
    %1590 = vmatpush1.msra.mxu0 %v393
    %1591 = vmatprep.subr.mxu0 %v398
    %1592 = vmatpush1.msra.mxu0 %v397
    %1593 = vmatprep.subr.mxu0 %v402
    %1594 = vmatpush1.msra.mxu0 %v401
    %1595 = vmatprep.subr.mxu0 %v406
    %1596 = vmatpush1.msra.mxu0 %v405
    %1597 = vmatprep.subr.mxu0 %v410
    %1598 = vmatpush1.msra.mxu0 %v409
    %1599 = vmatprep.subr.mxu0 %v414
    %1600 = vmatpush1.msra.mxu0 %v413
    %1601 = vmatprep.subr.mxu0 %v418
    %1602 = vmatpush1.msra.mxu0 %v417
    %1603 = vmatprep.subr.mxu0 %v422
    %1604 = vmatpush1.msra.mxu0 %v421
    %1605 = vmatprep.subr.mxu0 %v426
    %1606 = vmatpush1.msra.mxu0 %v425
    %1607 = vmatprep.subr.mxu0 %v430
    %1608 = vmatpush1.msra.mxu0 %v429
    %1609 = vmatprep.subr.mxu0 %v434
    %1610 = vmatpush1.msra.mxu0 %v433
    %1611 = vmatprep.subr.mxu0 %v438
    %1612 = vmatpush1.msra.mxu0 %v437
    %1613 = vmatprep.subr.mxu0 %v442
    %1614 = vmatpush1.msra.mxu0 %v441
    %1615 = vmatprep.subr.mxu0 %v446
    %1616 = vmatpush1.msra.mxu0 %v445
    %1617 = vmatprep.subr.mxu0 0.0
    %1618 = vmatpush1.msra.mxu0 0.0
    %1619 = vmatprep.subr.mxu0 0.0
    %1620 = vmatpush1.msra.mxu0 0.0
    %1621 = vmatprep.subr.mxu0 0.0
    %1622 = vmatpush1.msra.mxu0 0.0
    %1623 = vmatprep.subr.mxu0 0.0
    %1624 = vmatpush1.msra.mxu0 0.0
    %1625 = vmatprep.subr.mxu0 0.0
    %1626 = vmatpush1.msra.mxu0 0.0
    %1627 = vmatprep.subr.mxu0 0.0
    %1628 = vmatpush1.msra.mxu0 0.0
    %1629 = vmatprep.subr.mxu0 0.0
    %1630 = vmatpush1.msra.mxu0 0.0
    %1631 = vmatprep.subr.mxu0 0.0
    %1632 = vmatpush1.msra.mxu0 0.0
    %1633 = vmatprep.subr.mxu0 0.0
    %1634 = vmatpush1.msra.mxu0 0.0
    %1635 = vmatprep.subr.mxu0 0.0
    %1636 = vmatpush1.msra.mxu0 0.0
    %1637 = vmatprep.subr.mxu0 0.0
    %1638 = vmatpush1.msra.mxu0 0.0
    %1639 = vmatprep.subr.mxu0 0.0
    %1640 = vmatpush1.msra.mxu0 0.0
    %1641 = vmatprep.subr.mxu0 0.0
    %1642 = vmatpush1.msra.mxu0 0.0
    %1643 = vmatprep.subr.mxu0 0.0
    %1644 = vmatpush1.msra.mxu0 0.0
    %1645 = vmatprep.subr.mxu0 0.0
    %1646 = vmatpush1.msra.mxu0 0.0
    %1647 = vmatprep.subr.mxu0 0.0
    %1648 = vmatpush1.msra.mxu0 0.0
    %1649 = vmatprep.mubr.f32.mxu0 0.0
    %1650 = vmatmul.mubr.f32.gmra.mrb[0].mxu0 %v1506
    %v1651 = vpop.f32.mrb[0].mxu0
    %v1652 = vadd.f32 0.0, %v1651
    %v1653 = vpop.f32.mrb[0].mxu0
    %v1654 = vadd.f32 0.0, %v1653
    %1655 = vdwg.mxu0
    %v1656 = vadd.f32 %v1510, %v1581
    %v1657 = vadd.f32 %v1511, %v1583
    %v1658 = vadd.f32 %v1512, %v1652
    %v1659 = vadd.f32 %v1513, %v1654
    %v1660 = vxor.u32 %v1656, 2147483648
    %v1661 = vxor.u32 %v1657, 2147483648
    %v1662 = vxor.u32 %v1658, 2147483648
    %v1663 = vmul.f32 %v1660, 1.442695
    %v1664 = vpow.pop %v1663
    %v1665 = vmul.f32 %v1661, 1.442695
    %v1666 = vpow.pop %v1665
    %v1667 = vmul.f32 %v1662, 1.442695
    %v1668 = vpow.pop %v1667
    %v1669 = vadd.f32 %v1664, 1.0
    %v1670 = vadd.f32 %v1666, 1.0
    %v1671 = vadd.f32 %v1668, 1.0
    %v1672 = vrcp.pop %v1669
    %v1673 = vmul.f32 1.0, %v1672
    %v1674 = vrcp.pop %v1670
    %v1675 = vmul.f32 1.0, %v1674
    %v1676 = vrcp.pop %v1671
    %v1677 = vmul.f32 1.0, %v1676
    %v1678 = vtanh.pop %v1659
    %v1679 = vmul.f32 %v1675, %v1504
    %v1680 = vmul.f32 %v1673, %v1678
    %v1681 = vadd.f32 %v1679, %v1680
    %v1682 = vtanh.pop %v1681
    %v1683 = vmul.f32 %v1677, %v1682
    %s1684 = scalar_lea.vmem [#allocation5], 48
    %1685 = vst [vmem:[%s1684] sm:$0xff] %v1683
    %s1686 = scalar_lea.vmem [#allocation4], 224
    %v1687 = vld [vmem:[%s1686] sm:$0xff]
    %v1688 = vld [vmem:[%s1686 + $0x8] sm:$0xff]
    %v1689 = vld [vmem:[%s1686 + $0x10] sm:$0xff]
    %v1690 = vld [vmem:[%s1686 + $0x18] sm:$0xff]
    %1691 = vmatprep.subr.mxu0 %v384
    %1692 = vmatpush1.msra.mxu0 %v383
    %1693 = vmatprep.subr.mxu0 %v388
    %1694 = vmatpush1.msra.mxu0 %v387
    %1695 = vmatprep.subr.mxu0 %v392
    %1696 = vmatpush1.msra.mxu0 %v391
    %1697 = vmatprep.subr.mxu0 %v396
    %1698 = vmatpush1.msra.mxu0 %v395
    %1699 = vmatprep.subr.mxu0 %v400
    %1700 = vmatpush1.msra.mxu0 %v399
    %1701 = vmatprep.subr.mxu0 %v404
    %1702 = vmatpush1.msra.mxu0 %v403
    %1703 = vmatprep.subr.mxu0 %v408
    %1704 = vmatpush1.msra.mxu0 %v407
    %1705 = vmatprep.subr.mxu0 %v412
    %1706 = vmatpush1.msra.mxu0 %v411
    %1707 = vmatprep.subr.mxu0 %v416
    %1708 = vmatpush1.msra.mxu0 %v415
    %1709 = vmatprep.subr.mxu0 %v420
    %1710 = vmatpush1.msra.mxu0 %v419
    %1711 = vmatprep.subr.mxu0 %v424
    %1712 = vmatpush1.msra.mxu0 %v423
    %1713 = vmatprep.subr.mxu0 %v428
    %1714 = vmatpush1.msra.mxu0 %v427
    %1715 = vmatprep.subr.mxu0 %v432
    %1716 = vmatpush1.msra.mxu0 %v431
    %1717 = vmatprep.subr.mxu0 %v436
    %1718 = vmatpush1.msra.mxu0 %v435
    %1719 = vmatprep.subr.mxu0 %v440
    %1720 = vmatpush1.msra.mxu0 %v439
    %1721 = vmatprep.subr.mxu0 %v444
    %1722 = vmatpush1.msra.mxu0 %v443
    %1723 = vmatprep.subr.mxu0 0.0
    %1724 = vmatpush1.msra.mxu0 0.0
    %1725 = vmatprep.subr.mxu0 0.0
    %1726 = vmatpush1.msra.mxu0 0.0
    %1727 = vmatprep.subr.mxu0 0.0
    %1728 = vmatpush1.msra.mxu0 0.0
    %1729 = vmatprep.subr.mxu0 0.0
    %1730 = vmatpush1.msra.mxu0 0.0
    %1731 = vmatprep.subr.mxu0 0.0
    %1732 = vmatpush1.msra.mxu0 0.0
    %1733 = vmatprep.subr.mxu0 0.0
    %1734 = vmatpush1.msra.mxu0 0.0
    %1735 = vmatprep.subr.mxu0 0.0
    %1736 = vmatpush1.msra.mxu0 0.0
    %1737 = vmatprep.subr.mxu0 0.0
    %1738 = vmatpush1.msra.mxu0 0.0
    %1739 = vmatprep.subr.mxu0 0.0
    %1740 = vmatpush1.msra.mxu0 0.0
    %1741 = vmatprep.subr.mxu0 0.0
    %1742 = vmatpush1.msra.mxu0 0.0
    %1743 = vmatprep.subr.mxu0 0.0
    %1744 = vmatpush1.msra.mxu0 0.0
    %1745 = vmatprep.subr.mxu0 0.0
    %1746 = vmatpush1.msra.mxu0 0.0
    %1747 = vmatprep.subr.mxu0 0.0
    %1748 = vmatpush1.msra.mxu0 0.0
    %1749 = vmatprep.subr.mxu0 0.0
    %1750 = vmatpush1.msra.mxu0 0.0
    %1751 = vmatprep.subr.mxu0 0.0
    %1752 = vmatpush1.msra.mxu0 0.0
    %1753 = vmatprep.subr.mxu0 0.0
    %1754 = vmatpush1.msra.mxu0 0.0
    %1755 = vmatprep.mubr.f32.mxu0 0.0
    %1756 = vmatmul.mubr.f32.gmra.mrb[0].mxu0 %v1683
    %v1757 = vpop.f32.mrb[0].mxu0
    %v1758 = vadd.f32 0.0, %v1757
    %v1759 = vpop.f32.mrb[0].mxu0
    %v1760 = vadd.f32 0.0, %v1759
    %1761 = vdwg.mxu0
    %1762 = vmatprep.subr.mxu0 %v386
    %1763 = vmatpush1.msra.mxu0 %v385
    %1764 = vmatprep.subr.mxu0 %v390
    %1765 = vmatpush1.msra.mxu0 %v389
    %1766 = vmatprep.subr.mxu0 %v394
    %1767 = vmatpush1.msra.mxu0 %v393
    %1768 = vmatprep.subr.mxu0 %v398
    %1769 = vmatpush1.msra.mxu0 %v397
    %1770 = vmatprep.subr.mxu0 %v402
    %1771 = vmatpush1.msra.mxu0 %v401
    %1772 = vmatprep.subr.mxu0 %v406
    %1773 = vmatpush1.msra.mxu0 %v405
    %1774 = vmatprep.subr.mxu0 %v410
    %1775 = vmatpush1.msra.mxu0 %v409
    %1776 = vmatprep.subr.mxu0 %v414
    %1777 = vmatpush1.msra.mxu0 %v413
    %1778 = vmatprep.subr.mxu0 %v418
    %1779 = vmatpush1.msra.mxu0 %v417
    %1780 = vmatprep.subr.mxu0 %v422
    %1781 = vmatpush1.msra.mxu0 %v421
    %1782 = vmatprep.subr.mxu0 %v426
    %1783 = vmatpush1.msra.mxu0 %v425
    %1784 = vmatprep.subr.mxu0 %v430
    %1785 = vmatpush1.msra.mxu0 %v429
    %1786 = vmatprep.subr.mxu0 %v434
    %1787 = vmatpush1.msra.mxu0 %v433
    %1788 = vmatprep.subr.mxu0 %v438
    %1789 = vmatpush1.msra.mxu0 %v437
    %1790 = vmatprep.subr.mxu0 %v442
    %1791 = vmatpush1.msra.mxu0 %v441
    %1792 = vmatprep.subr.mxu0 %v446
    %1793 = vmatpush1.msra.mxu0 %v445
    %1794 = vmatprep.subr.mxu0 0.0
    %1795 = vmatpush1.msra.mxu0 0.0
    %1796 = vmatprep.subr.mxu0 0.0
    %1797 = vmatpush1.msra.mxu0 0.0
    %1798 = vmatprep.subr.mxu0 0.0
    %1799 = vmatpush1.msra.mxu0 0.0
    %1800 = vmatprep.subr.mxu0 0.0
    %1801 = vmatpush1.msra.mxu0 0.0
    %1802 = vmatprep.subr.mxu0 0.0
    %1803 = vmatpush1.msra.mxu0 0.0
    %1804 = vmatprep.subr.mxu0 0.0
    %1805 = vmatpush1.msra.mxu0 0.0
    %1806 = vmatprep.subr.mxu0 0.0
    %1807 = vmatpush1.msra.mxu0 0.0
    %1808 = vmatprep.subr.mxu0 0.0
    %1809 = vmatpush1.msra.mxu0 0.0
    %1810 = vmatprep.subr.mxu0 0.0
    %1811 = vmatpush1.msra.mxu0 0.0
    %1812 = vmatprep.subr.mxu0 0.0
    %1813 = vmatpush1.msra.mxu0 0.0
    %1814 = vmatprep.subr.mxu0 0.0
    %1815 = vmatpush1.msra.mxu0 0.0
    %1816 = vmatprep.subr.mxu0 0.0
    %1817 = vmatpush1.msra.mxu0 0.0
    %1818 = vmatprep.subr.mxu0 0.0
    %1819 = vmatpush1.msra.mxu0 0.0
    %1820 = vmatprep.subr.mxu0 0.0
    %1821 = vmatpush1.msra.mxu0 0.0
    %1822 = vmatprep.subr.mxu0 0.0
    %1823 = vmatpush1.msra.mxu0 0.0
    %1824 = vmatprep.subr.mxu0 0.0
    %1825 = vmatpush1.msra.mxu0 0.0
    %1826 = vmatprep.mubr.f32.mxu0 0.0
    %1827 = vmatmul.mubr.f32.gmra.mrb[0].mxu0 %v1683
    %v1828 = vpop.f32.mrb[0].mxu0
    %v1829 = vadd.f32 0.0, %v1828
    %v1830 = vpop.f32.mrb[0].mxu0
    %v1831 = vadd.f32 0.0, %v1830
    %1832 = vdwg.mxu0
    %v1833 = vadd.f32 %v1687, %v1758
    %v1834 = vadd.f32 %v1688, %v1760
    %v1835 = vadd.f32 %v1689, %v1829
    %v1836 = vadd.f32 %v1690, %v1831
    %v1837 = vxor.u32 %v1833, 2147483648
    %v1838 = vxor.u32 %v1834, 2147483648
    %v1839 = vxor.u32 %v1835, 2147483648
    %v1840 = vmul.f32 %v1837, 1.442695
    %v1841 = vpow.pop %v1840
    %v1842 = vmul.f32 %v1838, 1.442695
    %v1843 = vpow.pop %v1842
    %v1844 = vmul.f32 %v1839, 1.442695
    %v1845 = vpow.pop %v1844
    %v1846 = vadd.f32 %v1841, 1.0
    %v1847 = vadd.f32 %v1843, 1.0
    %v1848 = vadd.f32 %v1845, 1.0
    %v1849 = vrcp.pop %v1846
    %v1850 = vmul.f32 1.0, %v1849
    %v1851 = vrcp.pop %v1847
    %v1852 = vmul.f32 1.0, %v1851
    %v1853 = vrcp.pop %v1848
    %v1854 = vmul.f32 1.0, %v1853
    %v1855 = vtanh.pop %v1836
    %v1856 = vmul.f32 %v1852, %v1681
    %v1857 = vmul.f32 %v1850, %v1855
    %v1858 = vadd.f32 %v1856, %v1857
    %v1859 = vtanh.pop %v1858
    %v1860 = vmul.f32 %v1854, %v1859
    %s1861 = scalar_lea.vmem [#allocation5], 56
    %1862 = vst [vmem:[%s1861] sm:$0xff] %v1860
    %1863 = vst [vmem:[#allocation2] sm:$0xff] %v1860
    %1864 = vst [vmem:[#allocation3] sm:$0xff] %v1858
    %v1865 = vld [vmem:[#allocation5] sm:$0xff]
    %v1866 = vld [vmem:[#allocation5 + $0x8] sm:$0xff]
    %v1867 = vld [vmem:[#allocation5 + $0x10] sm:$0xff]
    %v1868 = vld [vmem:[#allocation5 + $0x18] sm:$0xff]
    %v1869 = vld [vmem:[#allocation5 + $0x20] sm:$0xff]
    %v1870 = vld [vmem:[#allocation5 + $0x28] sm:$0xff]
    %v1871 = vld [vmem:[#allocation5 + $0x30] sm:$0xff]
    %v1872 = vld [vmem:[#allocation5 + $0x38] sm:$0xff]
    %v1873 = vld [vmem:[%s6] sm:$0xff]
    %v1874 = vld [vmem:[%s6 + $0x8] sm:$0xff]
    %v1875 = vld [vmem:[%s6 + $0x10] sm:$0xff]
    %v1876 = vld [vmem:[%s6 + $0x18] sm:$0xff]
    %v1877 = vld [vmem:[%s6 + $0x20] sm:$0xff]
    %v1878 = vld [vmem:[%s6 + $0x28] sm:$0xff]
    %v1879 = vld [vmem:[%s6 + $0x30] sm:$0xff]
    %v1880 = vld [vmem:[%s6 + $0x38] sm:$0xff]
    %v1881 = vld [vmem:[%s6 + $0x40] sm:$0xff]
    %v1882 = vld [vmem:[%s6 + $0x48] sm:$0xff]
    %v1883 = vld [vmem:[%s6 + $0x50] sm:$0xff]
    %v1884 = vld [vmem:[%s6 + $0x58] sm:$0xff]
    %v1885 = vld [vmem:[%s6 + $0x60] sm:$0xff]
    %v1886 = vld [vmem:[%s6 + $0x68] sm:$0xff]
    %v1887 = vld [vmem:[%s6 + $0x70] sm:$0xff]
    %v1888 = vld [vmem:[%s6 + $0x78] sm:$0xff]
    %v1889 = vld [vmem:[%s7] sm:$0x1]
    %v1891 = vlaneseq
    %v1892 = vshrl.u32 %v1891, 7
    %v1893 = vsub.s32 0, %v1892
    %v1894 = vrot.slane %v1889, %v1893
    %1896 = vmatprep.subr.mxu0 0.0
    %1897 = vmatpush1.msra.mxu0 %v1873
    %1898 = vmatprep.subr.mxu0 0.0
    %1899 = vmatpush1.msra.mxu0 %v1874
    %1900 = vmatprep.subr.mxu0 0.0
    %1901 = vmatpush1.msra.mxu0 %v1875
    %1902 = vmatprep.subr.mxu0 0.0
    %1903 = vmatpush1.msra.mxu0 %v1876
    %1904 = vmatprep.subr.mxu0 0.0
    %1905 = vmatpush1.msra.mxu0 %v1877
    %1906 = vmatprep.subr.mxu0 0.0
    %1907 = vmatpush1.msra.mxu0 %v1878
    %1908 = vmatprep.subr.mxu0 0.0
    %1909 = vmatpush1.msra.mxu0 %v1879
    %1910 = vmatprep.subr.mxu0 0.0
    %1911 = vmatpush1.msra.mxu0 %v1880
    %1912 = vmatprep.subr.mxu0 0.0
    %1913 = vmatpush1.msra.mxu0 %v1881
    %1914 = vmatprep.subr.mxu0 0.0
    %1915 = vmatpush1.msra.mxu0 %v1882
    %1916 = vmatprep.subr.mxu0 0.0
    %1917 = vmatpush1.msra.mxu0 %v1883
    %1918 = vmatprep.subr.mxu0 0.0
    %1919 = vmatpush1.msra.mxu0 %v1884
    %1920 = vmatprep.subr.mxu0 0.0
    %1921 = vmatpush1.msra.mxu0 %v1885
    %1922 = vmatprep.subr.mxu0 0.0
    %1923 = vmatpush1.msra.mxu0 %v1886
    %1924 = vmatprep.subr.mxu0 0.0
    %1925 = vmatpush1.msra.mxu0 %v1887
    %1926 = vmatprep.subr.mxu0 0.0
    %1927 = vmatpush1.msra.mxu0 %v1888
    %1928 = vmatprep.subr.mxu0 0.0
    %1929 = vmatpush1.msra.mxu0 0.0
    %1930 = vmatprep.subr.mxu0 0.0
    %1931 = vmatpush1.msra.mxu0 0.0
    %1932 = vmatprep.subr.mxu0 0.0
    %1933 = vmatpush1.msra.mxu0 0.0
    %1934 = vmatprep.subr.mxu0 0.0
    %1935 = vmatpush1.msra.mxu0 0.0
    %1936 = vmatprep.subr.mxu0 0.0
    %1937 = vmatpush1.msra.mxu0 0.0
    %1938 = vmatprep.subr.mxu0 0.0
    %1939 = vmatpush1.msra.mxu0 0.0
    %1940 = vmatprep.subr.mxu0 0.0
    %1941 = vmatpush1.msra.mxu0 0.0
    %1942 = vmatprep.subr.mxu0 0.0
    %1943 = vmatpush1.msra.mxu0 0.0
    %1944 = vmatprep.subr.mxu0 0.0
    %1945 = vmatpush1.msra.mxu0 0.0
    %1946 = vmatprep.subr.mxu0 0.0
    %1947 = vmatpush1.msra.mxu0 0.0
    %1948 = vmatprep.subr.mxu0 0.0
    %1949 = vmatpush1.msra.mxu0 0.0
    %1950 = vmatprep.subr.mxu0 0.0
    %1951 = vmatpush1.msra.mxu0 0.0
    %1952 = vmatprep.subr.mxu0 0.0
    %1953 = vmatpush1.msra.mxu0 0.0
    %1954 = vmatprep.subr.mxu0 0.0
    %1955 = vmatpush1.msra.mxu0 0.0
    %1956 = vmatprep.subr.mxu0 0.0
    %1957 = vmatpush1.msra.mxu0 0.0
    %1958 = vmatprep.subr.mxu0 0.0
    %1959 = vmatpush1.msra.mxu0 0.0
    %1960 = vmatprep.mubr.f32.mxu0 0.0
    %1961 = vmatmul.mubr.f32.gmra.mrb[0].mxu0 %v1865
    %v1962 = vpop.f32.mrb[0].mxu0
    %v1963 = vadd.f32 %v1894, %v1962
    %v1964 = vpop.f32.mrb[0].mxu0
    %1965 = vmatprep.mubr.f32.mxu0 0.0
    %1966 = vmatmul.mubr.f32.gmra.mrb[0].mxu0 %v1866
    %v1967 = vpop.f32.mrb[0].mxu0
    %v1968 = vadd.f32 %v1894, %v1967
    %v1969 = vpop.f32.mrb[0].mxu0
    %1970 = vmatprep.mubr.f32.mxu0 0.0
    %1971 = vmatmul.mubr.f32.gmra.mrb[0].mxu0 %v1867
    %v1972 = vpop.f32.mrb[0].mxu0
    %v1973 = vadd.f32 %v1894, %v1972
    %v1974 = vpop.f32.mrb[0].mxu0
    %1975 = vmatprep.mubr.f32.mxu0 0.0
    %1976 = vmatmul.mubr.f32.gmra.mrb[0].mxu0 %v1868
    %v1977 = vpop.f32.mrb[0].mxu0
    %v1978 = vadd.f32 %v1894, %v1977
    %v1979 = vpop.f32.mrb[0].mxu0
    %1980 = vmatprep.mubr.f32.mxu0 0.0
    %1981 = vmatmul.mubr.f32.gmra.mrb[0].mxu0 %v1869
    %v1982 = vpop.f32.mrb[0].mxu0
    %v1983 = vadd.f32 %v1894, %v1982
    %v1984 = vpop.f32.mrb[0].mxu0
    %1985 = vmatprep.mubr.f32.mxu0 0.0
    %1986 = vmatmul.mubr.f32.gmra.mrb[0].mxu0 %v1870
    %v1987 = vpop.f32.mrb[0].mxu0
    %v1988 = vadd.f32 %v1894, %v1987
    %v1989 = vpop.f32.mrb[0].mxu0
    %1990 = vmatprep.mubr.f32.mxu0 0.0
    %1991 = vmatmul.mubr.f32.gmra.mrb[0].mxu0 %v1871
    %v1992 = vpop.f32.mrb[0].mxu0
    %v1993 = vadd.f32 %v1894, %v1992
    %v1994 = vpop.f32.mrb[0].mxu0
    %1995 = vmatprep.mubr.f32.mxu0 0.0
    %1996 = vmatmul.mubr.f32.gmra.mrb[0].mxu0 %v1872
    %v1997 = vpop.f32.mrb[0].mxu0
    %v1998 = vadd.f32 %v1894, %v1997
    %v1999 = vpop.f32.mrb[0].mxu0
    %2000 = vdwg.mxu0
    %v2001 = vsel %vm100, %v1963, 0.0
    %2002 = vadd.xlane.f32.xlu0 %v2001
    %v2003 = vpop.xlane.xlu0 %2002
    %v2004 = vsel %vm100, %v1968, 0.0
    %2005 = vadd.xlane.f32.xlu0 %v2004
    %v2006 = vpop.xlane.xlu0 %2005
    %v2007 = vsel %vm100, %v1973, 0.0
    %2008 = vadd.xlane.f32.xlu0 %v2007
    %v2009 = vpop.xlane.xlu0 %2008
    %v2010 = vsel %vm100, %v1978, 0.0
    %2011 = vadd.xlane.f32.xlu0 %v2010
    %v2012 = vpop.xlane.xlu0 %2011
    %v2013 = vsel %vm100, %v1983, 0.0
    %2014 = vadd.xlane.f32.xlu0 %v2013
    %v2015 = vpop.xlane.xlu0 %2014
    %v2016 = vsel %vm100, %v1988, 0.0
    %2017 = vadd.xlane.f32.xlu0 %v2016
    %v2018 = vpop.xlane.xlu0 %2017
    %v2019 = vsel %vm100, %v1993, 0.0
    %2020 = vadd.xlane.f32.xlu0 %v2019
    %v2021 = vpop.xlane.xlu0 %2020
    %v2022 = vsel %vm100, %v1998, 0.0
    %2023 = vadd.xlane.f32.xlu0 %v2022
    %v2024 = vpop.xlane.xlu0 %2023
    %v2025 = vrcp.pop 16.0
    %v2026 = vmul.f32 %v2003, %v2025
    %v2027 = vmul.f32 %v2006, %v2025
    %v2028 = vmul.f32 %v2009, %v2025
    %v2029 = vmul.f32 %v2012, %v2025
    %v2030 = vmul.f32 %v2015, %v2025
    %v2031 = vmul.f32 %v2018, %v2025
    %v2032 = vmul.f32 %v2021, %v2025
    %v2033 = vmul.f32 %v2024, %v2025
    %v2034 = vsub.f32 %v1963, %v2026
    %v2035 = vsub.f32 %v1968, %v2027
    %v2036 = vsub.f32 %v1973, %v2028
    %v2037 = vsub.f32 %v1978, %v2029
    %v2038 = vsub.f32 %v1983, %v2030
    %v2039 = vsub.f32 %v1988, %v2031
    %v2040 = vsub.f32 %v1993, %v2032
    %v2041 = vsub.f32 %v1998, %v2033
    %v2042 = vmul.f32 %v2034, %v2034
    %v2043 = vmul.f32 %v2035, %v2035
    %v2044 = vmul.f32 %v2036, %v2036
    %v2045 = vmul.f32 %v2037, %v2037
    %v2046 = vmul.f32 %v2038, %v2038
    %v2047 = vmul.f32 %v2039, %v2039
    %v2048 = vmul.f32 %v2040, %v2040
    %v2049 = vmul.f32 %v2041, %v2041
    %v2050 = vsel %vm100, %v2042, 0.0
    %2051 = vadd.xlane.f32.xlu0 %v2050
    %v2052 = vpop.xlane.xlu0 %2051
    %v2053 = vsel %vm100, %v2043, 0.0
    %2054 = vadd.xlane.f32.xlu0 %v2053
    %v2055 = vpop.xlane.xlu0 %2054
    %v2056 = vsel %vm100, %v2044, 0.0
    %2057 = vadd.xlane.f32.xlu0 %v2056
    %v2058 = vpop.xlane.xlu0 %2057
    %v2059 = vsel %vm100, %v2045, 0.0
    %2060 = vadd.xlane.f32.xlu0 %v2059
    %v2061 = vpop.xlane.xlu0 %2060
    %v2062 = vsel %vm100, %v2046, 0.0
    %2063 = vadd.xlane.f32.xlu0 %v2062
    %v2064 = vpop.xlane.xlu0 %2063
    %v2065 = vsel %vm100, %v2047, 0.0
    %2066 = vadd.xlane.f32.xlu0 %v2065
    %v2067 = vpop.xlane.xlu0 %2066
    %v2068 = vsel %vm100, %v2048, 0.0
    %2069 = vadd.xlane.f32.xlu0 %v2068
    %v2070 = vpop.xlane.xlu0 %2069
    %v2071 = vsel %vm100, %v2049, 0.0
    %2072 = vadd.xlane.f32.xlu0 %v2071
    %v2073 = vpop.xlane.xlu0 %2072
    %v2074 = vmul.f32 %v2052, %v2025
    %v2075 = vmul.f32 %v2055, %v2025
    %v2076 = vmul.f32 %v2058, %v2025
    %v2077 = vmul.f32 %v2061, %v2025
    %v2078 = vmul.f32 %v2064, %v2025
    %v2079 = vmul.f32 %v2067, %v2025
    %v2080 = vmul.f32 %v2070, %v2025
    %v2081 = vmul.f32 %v2073, %v2025
    %v2082 = vld [vmem:[%s8] sm:$0x1]
    %v2084 = vlaneseq
    %v2085 = vshrl.u32 %v2084, 7
    %v2086 = vsub.s32 0, %v2085
    %v2087 = vrot.slane %v2082, %v2086
    %v2089 = vmul.f32 %v2087, %v2034
    %v2090 = vmul.f32 %v2087, %v2035
    %v2091 = vmul.f32 %v2087, %v2036
    %v2092 = vmul.f32 %v2087, %v2037
    %v2093 = vmul.f32 %v2087, %v2038
    %v2094 = vmul.f32 %v2087, %v2039
    %v2095 = vmul.f32 %v2087, %v2040
    %v2096 = vmul.f32 %v2087, %v2041
    %v2097 = vadd.f32 %v2074, 1e-08
    %v2098 = vadd.f32 %v2075, 1e-08
    %v2099 = vadd.f32 %v2076, 1e-08
    %v2100 = vadd.f32 %v2077, 1e-08
    %v2101 = vadd.f32 %v2078, 1e-08
    %v2102 = vadd.f32 %v2079, 1e-08
    %v2103 = vadd.f32 %v2080, 1e-08
    %v2104 = vadd.f32 %v2081, 1e-08
    %v2105 = vrsqrt.pop %v2097
    %v2106 = vrsqrt.pop %v2098
    %v2107 = vrsqrt.pop %v2099
    %v2108 = vrsqrt.pop %v2100
    %v2109 = vrsqrt.pop %v2101
    %v2110 = vrsqrt.pop %v2102
    %v2111 = vrsqrt.pop %v2103
    %v2112 = vrsqrt.pop %v2104
    %v2113 = vmul.f32 %v2089, %v2105
    %v2114 = vmul.f32 %v2090, %v2106
    %v2115 = vmul.f32 %v2091, %v2107
    %v2116 = vmul.f32 %v2092, %v2108
    %v2117 = vmul.f32 %v2093, %v2109
    %v2118 = vmul.f32 %v2094, %v2110
    %v2119 = vmul.f32 %v2095, %v2111
    %v2120 = vmul.f32 %v2096, %v2112
    %v2121 = vld [vmem:[%s9] sm:$0x1]
    %v2123 = vlaneseq
    %v2124 = vshrl.u32 %v2123, 7
    %v2125 = vsub.s32 0, %v2124
    %v2126 = vrot.slane %v2121, %v2125
    %v2128 = vadd.f32 %v2113, %v2126
    %v2129 = vadd.f32 %v2114, %v2126
    %v2130 = vadd.f32 %v2115, %v2126
    %v2131 = vadd.f32 %v2116, %v2126
    %v2132 = vadd.f32 %v2117, %v2126
    %v2133 = vadd.f32 %v2118, %v2126
    %v2134 = vadd.f32 %v2119, %v2126
    %v2135 = vadd.f32 %v2120, %v2126
    %v2136 = vld [vmem:[%s0] sm:$0xff]
    %v2137 = vld [vmem:[%s0 + $0x8] sm:$0xff]
    %v2138 = vld [vmem:[%s0 + $0x10] sm:$0xff]
    %v2139 = vld [vmem:[%s0 + $0x18] sm:$0xff]
    %v2140 = vld [vmem:[%s0 + $0x20] sm:$0xff]
    %v2141 = vld [vmem:[%s0 + $0x28] sm:$0xff]
    %v2142 = vld [vmem:[%s0 + $0x30] sm:$0xff]
    %v2143 = vld [vmem:[%s0 + $0x38] sm:$0xff]
    %v2144 = vadd.f32 %v2136, %v2128
    %v2145 = vadd.f32 %v2137, %v2129
    %v2146 = vadd.f32 %v2138, %v2130
    %v2147 = vadd.f32 %v2139, %v2131
    %v2148 = vadd.f32 %v2140, %v2132
    %v2149 = vadd.f32 %v2141, %v2133
    %v2150 = vadd.f32 %v2142, %v2134
    %v2151 = vadd.f32 %v2143, %v2135
    %2152 = vst.msk [vmem:[#allocation9] sm:$0xff] %vm100, %v2144
    %2153 = vst.msk [vmem:[#allocation9 + $0x8] sm:$0xff] %vm100, %v2145
    %2154 = vst.msk [vmem:[#allocation9 + $0x10] sm:$0xff] %vm100, %v2146
    %2155 = vst.msk [vmem:[#allocation9 + $0x18] sm:$0xff] %vm100, %v2147
    %2156 = vst.msk [vmem:[#allocation9 + $0x20] sm:$0xff] %vm100, %v2148
    %2157 = vst.msk [vmem:[#allocation9 + $0x28] sm:$0xff] %vm100, %v2149
    %2158 = vst.msk [vmem:[#allocation9 + $0x30] sm:$0xff] %vm100, %v2150
    %2159 = vst.msk [vmem:[#allocation9 + $0x38] sm:$0xff] %vm100, %v2151
    // Predicated region
    $region50: #{tpu_custom_call.1} parent=1 // pred_check
      %p2160 = pneg %p54
    $region51: #{tpu_custom_call.1} parent=1 // pred_check_branch
      %2162 = sbr.rel (%p2160) target = $region53
    $region52: #{tpu_custom_call.1} parent=1 // pred_region
      %2163 = vst [vmem:[#allocation10] sm:$0xff] %v1860
      %2164 = vst [vmem:[#allocation12] sm:$0xff] %v1858
    $region53: #{tpu_custom_call.1} parent=1 // pred_fallthru
      _
    // Predicated region
    $region54: #{tpu_custom_call.1} parent=1 // pred_check
      _
    $region55: #{tpu_custom_call.1} parent=1 // pred_check_branch
      %2166 = sbr.rel (0) target = $region57
    $region56: #{tpu_custom_call.1} parent=1 // pred_region
      %s2168 = ssub.s32 1024, 1024
      %2169 = vsyncadd [#allocation8], %s2168
      %s2170 = sshll.u32 [#allocation9], 4
      %s2171 = int_to_ptr.vmem [resolvable:$true] %s2170
      %2176 = dma.vmem_to_hbm [thread:$0]  %s2171, 1024, %s10, [#allocation8], 128, 128, 8
    $region57: #{tpu_custom_call.1} parent=1 // pred_fallthru
      _
    // Predicated region
    $region58: #{tpu_custom_call.1} parent=1 // pred_check
      _
    $region59: #{tpu_custom_call.1} parent=1 // pred_check_branch
      %2178 = sbr.rel (0) target = $region61
    $region60: #{tpu_custom_call.1} parent=1 // pred_region
      %s2180 = ssub.s32 128, 128
      %2181 = vsyncadd [#allocation11], %s2180
      %s2183 = sshll.u32 [#allocation10], 4
      %s2184 = int_to_ptr.vmem [resolvable:$true] %s2183
      %2186 = dma.vmem_to_hbm [thread:$0]  %s2184, 128, %s11, [#allocation11]
    $region61: #{tpu_custom_call.1} parent=1 // pred_fallthru
      _
    // Predicated region
    $region62: #{tpu_custom_call.1} parent=1 // pred_check
      _
    $region63: #{tpu_custom_call.1} parent=1 // pred_check_branch
      %2188 = sbr.rel (0) target = $region65
    $region64: #{tpu_custom_call.1} parent=1 // pred_region
      %s2190 = ssub.s32 128, 128
      %2191 = vsyncadd [#allocation11], %s2190
      %s2193 = sshll.u32 [#allocation12], 4
      %s2194 = int_to_ptr.vmem [resolvable:$true] %s2193
      %2196 = dma.vmem_to_hbm [thread:$0]  %s2194, 128, %s12, [#allocation11]
    $region65: #{tpu_custom_call.1} parent=1 // pred_fallthru
      _
    // Predicated region
    $region66: #{tpu_custom_call.1} parent=1 // pred_check
      _
    $region67: #{tpu_custom_call.1} parent=1 // pred_check_branch
      %2198 = sbr.rel (0) target = $region69
    $region68: #{tpu_custom_call.1} parent=1 // pred_region
      %2199 = dma.done [#allocation8], 1024
    $region69: #{tpu_custom_call.1} parent=1 // pred_fallthru
      _
    // Predicated region
    $region70: #{tpu_custom_call.1} parent=1 // pred_check
      _
    $region71: #{tpu_custom_call.1} parent=1 // pred_check_branch
      %2201 = sbr.rel (0) target = $region73
    $region72: #{tpu_custom_call.1} parent=1 // pred_region
      %2202 = dma.done [#allocation11], 128
    $region73: #{tpu_custom_call.1} parent=1 // pred_fallthru
      _
    // Predicated region
    $region74: #{tpu_custom_call.1} parent=1 // pred_check
      _
    $region75: #{tpu_custom_call.1} parent=1 // pred_check_branch
      %2204 = sbr.rel (0) target = $region77
    $region76: #{tpu_custom_call.1} parent=1 // pred_region
      %2205 = dma.done [#allocation11], 128
    $region77: #{tpu_custom_call.1} parent=1 // pred_fallthru
      _
    %2206 = vsyncpa [#allocation7], 1
    %2207 = vsyncpa [#allocation8], 1
    %2208 = vsyncpa [#allocation11], 1

</llo_original>
